<compile_context>
chip_gen: v6e
topology: v6e:2x2x1
jax: 0.10.0
libtpu: 0.0.40
codegen_flags: <defaults>
</compile_context>

<pallas_src>
import jax
import jax.numpy as jnp
from jax.experimental import pallas as pl
from jax.experimental.pallas import tpu as pltpu

# ---- problem sizes (small, consistent with the module) ----
D_MODEL = 32
NHEAD = 4
HEAD_DIM = D_MODEL // NHEAD
DIM_FF = 64
SEQ = 8
BATCH = 2
N_TOK = SEQ * BATCH          # flattened (seq, batch) token rows
EPS = 1e-5
NEG_INF = -1e9               # additive mask value (exp underflows to exactly 0)

# ---- single packed parameter slab: (PARAM_ROWS, 128) f32, all offsets 8-aligned ----
LANES = 128
ROW_WQKV = 0                 # (32, 96)  in_proj_weight^T  [Wq^T | Wk^T | Wv^T]
ROW_WO = 32                  # (32, 32)  out_proj.weight^T
ROW_W1 = 64                  # (32, 64)  linear1.weight^T
ROW_W2 = 96                  # (64, 32)  linear2.weight^T
ROW_BQKV = 160               # (1, 96)   in_proj_bias
ROW_BO = 168                 # (1, 32)
ROW_B1 = 176                 # (1, 64)
ROW_B2 = 184                 # (1, 32)
ROW_G1 = 192                 # (1, 32)
ROW_BE1 = 200
ROW_G2 = 208
ROW_BE2 = 216
ROW_MASK = 224               # (16, 16)  additive batch-separation mask (8-aligned)
PARAM_ROWS = 240


def _layernorm(x, gamma, beta):
    mu = jnp.mean(x, axis=-1, keepdims=True)
    var = jnp.mean((x - mu) ** 2, axis=-1, keepdims=True)   # biased var, like torch
    return (x - mu) * jax.lax.rsqrt(var + EPS) * gamma + beta


def encoder_layer_kernel(x_ref, p_ref, o_ref):
    # x_ref: (N_TOK, E) flattened tokens, row r = (seq s = r // BATCH, batch b = r % BATCH)
    x = x_ref[...]                                            # (16, 32) f32

    # ---- parameters: static, sublane-aligned ref slices (cheap aligned loads) ----
    wqkv = p_ref[ROW_WQKV:ROW_WQKV + D_MODEL, 0:3 * D_MODEL]  # (32, 96)
    wo = p_ref[ROW_WO:ROW_WO + D_MODEL, 0:D_MODEL]            # (32, 32)
    w1 = p_ref[ROW_W1:ROW_W1 + D_MODEL, 0:DIM_FF]             # (32, 64)
    w2 = p_ref[ROW_W2:ROW_W2 + DIM_FF, 0:D_MODEL]             # (64, 32)
    bqkv = p_ref[ROW_BQKV:ROW_BQKV + 1, 0:3 * D_MODEL]        # (1, 96)
    bo = p_ref[ROW_BO:ROW_BO + 1, 0:D_MODEL]                  # (1, 32)
    b1 = p_ref[ROW_B1:ROW_B1 + 1, 0:DIM_FF]                   # (1, 64)
    b2 = p_ref[ROW_B2:ROW_B2 + 1, 0:D_MODEL]                  # (1, 32)
    g1 = p_ref[ROW_G1:ROW_G1 + 1, 0:D_MODEL]
    be1 = p_ref[ROW_BE1:ROW_BE1 + 1, 0:D_MODEL]
    g2 = p_ref[ROW_G2:ROW_G2 + 1, 0:D_MODEL]
    be2 = p_ref[ROW_BE2:ROW_BE2 + 1, 0:D_MODEL]
    mask_bias = p_ref[ROW_MASK:ROW_MASK + N_TOK, 0:N_TOK]     # (16, 16)

    # ---------------- self-attention ----------------
    # Fused QKV projection: ONE lane-dense (16,32)x(32,96) MXU matmul + one bias row.
    qkv = jnp.dot(x, wqkv, preferred_element_type=jnp.float32) + bqkv     # (16, 96)

    # Per-head operands with Dh=8 (no zero-padding carried through score/ctx path).
    def head(block, h):
        base = block * D_MODEL + h * HEAD_DIM
        return qkv[:, base:base + HEAD_DIM]                   # (16, 8)

    qh = jnp.stack([head(0, h) for h in range(NHEAD)], axis=0)    # (4, 16, 8)
    kh = jnp.stack([head(1, h) for h in range(NHEAD)], axis=0)
    vh = jnp.stack([head(2, h) for h in range(NHEAD)], axis=0)

    scale = 1.0 / (HEAD_DIM ** 0.5)
    s = jnp.einsum('hqd,hkd->hqk', qh, kh,
                   preferred_element_type=jnp.float32) * scale            # (4, 16, 16)
    s = s + mask_bias[None, :, :]            # keep tokens within their own batch element

    m = jnp.max(s, axis=-1, keepdims=True)
    p = jnp.exp(s - m)
    denom = jnp.sum(p, axis=-1, keepdims=True)
    p = p * pl.reciprocal(denom, approx=True)                 # single-slot EUP vrcp

    ctx = jnp.einsum('hqk,hkd->hqd', p, vh,
                     preferred_element_type=jnp.float32)                   # (4, 16, 8)

    # Recover lane-dense (N, H*Dh = 32) context, then ONE out-projection matmul
    # (head reduction happens inside the MXU contraction, no VPU head-sum).
    ctx2 = jnp.concatenate([ctx[h] for h in range(NHEAD)], axis=-1)        # (16, 32)
    attn = jnp.dot(ctx2, wo, preferred_element_type=jnp.float32) + bo      # (16, 32)

    # dropout1 is identity in eval mode
    y = _layernorm(x + attn, g1, be1)                          # norm1(x + SA(x))

    # ---------------- feed-forward (relu) ----------------
    h1 = jnp.maximum(jnp.dot(y, w1, preferred_element_type=jnp.float32) + b1, 0.0)
    ff = jnp.dot(h1, w2, preferred_element_type=jnp.float32) + b2

    # dropout / dropout2 are identity in eval mode
    o_ref[...] = _layernorm(y + ff, g2, be2)                   # norm2(y + FF(y))


def pack_params(params):
    """Host-side packing of all parameters into a single lane-dense (240,128) slab."""
    (wqkv, bqkv, wo, bo, w1, b1, w2, b2, g1, be1, g2, be2) = params
    P = jnp.zeros((PARAM_ROWS, LANES), jnp.float32)

    P = P.at[ROW_WQKV:ROW_WQKV + D_MODEL, 0:3 * D_MODEL].set(wqkv.T.astype(jnp.float32))
    P = P.at[ROW_WO:ROW_WO + D_MODEL, 0:D_MODEL].set(wo.T.astype(jnp.float32))
    P = P.at[ROW_W1:ROW_W1 + D_MODEL, 0:DIM_FF].set(w1.T.astype(jnp.float32))
    P = P.at[ROW_W2:ROW_W2 + DIM_FF, 0:D_MODEL].set(w2.T.astype(jnp.float32))

    P = P.at[ROW_BQKV, 0:3 * D_MODEL].set(bqkv.astype(jnp.float32))
    P = P.at[ROW_BO, 0:D_MODEL].set(bo.astype(jnp.float32))
    P = P.at[ROW_B1, 0:DIM_FF].set(b1.astype(jnp.float32))
    P = P.at[ROW_B2, 0:D_MODEL].set(b2.astype(jnp.float32))
    P = P.at[ROW_G1, 0:D_MODEL].set(g1.astype(jnp.float32))
    P = P.at[ROW_BE1, 0:D_MODEL].set(be1.astype(jnp.float32))
    P = P.at[ROW_G2, 0:D_MODEL].set(g2.astype(jnp.float32))
    P = P.at[ROW_BE2, 0:D_MODEL].set(be2.astype(jnp.float32))

    # Additive mask separating the BATCH interleaved token rows (row r -> batch r % BATCH).
    r = jnp.arange(N_TOK)
    same_batch = (r[:, None] % BATCH) == (r[None, :] % BATCH)
    mask_bias = jnp.where(same_batch, 0.0, NEG_INF).astype(jnp.float32)
    P = P.at[ROW_MASK:ROW_MASK + N_TOK, 0:N_TOK].set(mask_bias)
    return P


@jax.jit
def transformer_encoder_layer(src_sbe, param_slab):
    """src_sbe: (SEQ, BATCH, D_MODEL) f32, PyTorch batch_first=False layout."""
    # Contiguous reshape (no transpose / no data movement): row r = s*BATCH + b.
    x2 = src_sbe.reshape(N_TOK, D_MODEL)

    vmem = pl.BlockSpec(memory_space=pltpu.MemorySpace.VMEM)
    out2 = pl.pallas_call(
        encoder_layer_kernel,
        out_shape=jax.ShapeDtypeStruct((N_TOK, D_MODEL), jnp.float32),
        # Single invocation (no grid): whole problem lives in VMEM, 2 input DMAs total.
        in_specs=[vmem, vmem],
        out_specs=vmem,
    )(x2, param_slab)

    return out2.reshape(SEQ, BATCH, D_MODEL)


def make_params(key):
    ks = jax.random.split(key, 8)

    def unif(k, shape, fan_in):
        bound = 1.0 / (fan_in ** 0.5)
        return jax.random.uniform(k, shape, jnp.float32, -bound, bound)

    wqkv = unif(ks[0], (3 * D_MODEL, D_MODEL), D_MODEL)
    bqkv = unif(ks[1], (3 * D_MODEL,), D_MODEL)
    wo = unif(ks[2], (D_MODEL, D_MODEL), D_MODEL)
    bo = unif(ks[3], (D_MODEL,), D_MODEL)
    w1 = unif(ks[4], (DIM_FF, D_MODEL), D_MODEL)
    b1 = unif(ks[5], (DIM_FF,), D_MODEL)
    w2 = unif(ks[6], (D_MODEL, DIM_FF), DIM_FF)
    b2 = unif(ks[7], (D_MODEL,), DIM_FF)
    g1 = jnp.ones((D_MODEL,), jnp.float32)
    be1 = jnp.zeros((D_MODEL,), jnp.float32)
    g2 = jnp.ones((D_MODEL,), jnp.float32)
    be2 = jnp.zeros((D_MODEL,), jnp.float32)
    return (wqkv, bqkv, wo, bo, w1, b1, w2, b2, g1, be1, g2, be2)


def reference(src_sbe, params):
    """Pure-JAX reference mirroring the PyTorch (post-norm, relu, eval) forward."""
    (wqkv, bqkv, wo, bo, w1, b1, w2, b2, g1, be1, g2, be2) = params
    x = src_sbe                                            # (S, B, E)
    qkv = x @ wqkv.T + bqkv
    q, k, v = jnp.split(qkv, 3, axis=-1)

    def heads(t):                                          # (S,B,E) -> (B,H,S,Dh)
        return t.reshape(SEQ, BATCH, NHEAD, HEAD_DIM).transpose(1, 2, 0, 3)

    qh, kh, vh = heads(q), heads(k), heads(v)
    s = jnp.einsum('bhqd,bhkd->bhqk', qh, kh) / (HEAD_DIM ** 0.5)
    p = jax.nn.softmax(s, axis=-1)
    a = jnp.einsum('bhqk,bhkd->bhqd', p, vh)
    a = a.transpose(2, 0, 1, 3).reshape(SEQ, BATCH, D_MODEL)
    a = a @ wo.T + bo

    def ln(t, g, b):
        mu = t.mean(-1, keepdims=True)
        var = ((t - mu) ** 2).mean(-1, keepdims=True)
        return (t - mu) / jnp.sqrt(var + EPS) * g + b

    y = ln(x + a, g1, be1)
    ff = jnp.maximum(y @ w1.T + b1, 0.0) @ w2.T + b2
    return ln(y + ff, g2, be2)


if __name__ == "__main__":
    key = jax.random.PRNGKey(0)
    k_src, k_par = jax.random.split(key)
    src = jax.random.normal(k_src, (SEQ, BATCH, D_MODEL), jnp.float32)
    params = make_params(k_par)
    param_slab = pack_params(params)

    out = transformer_encoder_layer(src, param_slab)
    out = jax.block_until_ready(out)

    ref = reference(src, params)
    assert out.shape == (SEQ, BATCH, D_MODEL)
    # approx=True reciprocal in the softmax -> relaxed tolerance vs. exact reference
    assert jnp.allclose(out, ref, atol=2e-3, rtol=2e-3), "mismatch vs reference"
    print("KERNEL_OK")
</pallas_src>

<mosaic_0001>
module attributes {stable_mosaic.version = 11 : i64} {
  func.func @encoder_layer_kernel(%arg0: memref<16x32xf32, #tpu.memory_space<vmem>>, %arg1: memref<240x128xf32, #tpu.memory_space<vmem>>, %arg2: memref<16x32xf32, #tpu.memory_space<vmem>>) attributes {dimension_semantics = [], scalar_prefetch = 0 : i64, scratch_operands = 0 : i64, tpu.core_type = #tpu.core_type<tc>} {
    %c0 = arith.constant 0 : index
    %c0_0 = arith.constant 0 : index
    %0 = vector.load %arg0[%c0, %c0_0] : memref<16x32xf32, #tpu.memory_space<vmem>>, vector<16x32xf32>
    %c0_1 = arith.constant 0 : index
    %c0_2 = arith.constant 0 : index
    %1 = vector.load %arg1[%c0_1, %c0_2] : memref<240x128xf32, #tpu.memory_space<vmem>>, vector<32x96xf32>
    %c32 = arith.constant 32 : index
    %c0_3 = arith.constant 0 : index
    %2 = vector.load %arg1[%c32, %c0_3] : memref<240x128xf32, #tpu.memory_space<vmem>>, vector<32x32xf32>
    %c64 = arith.constant 64 : index
    %c0_4 = arith.constant 0 : index
    %3 = vector.load %arg1[%c64, %c0_4] : memref<240x128xf32, #tpu.memory_space<vmem>>, vector<32x64xf32>
    %c96 = arith.constant 96 : index
    %c0_5 = arith.constant 0 : index
    %4 = vector.load %arg1[%c96, %c0_5] : memref<240x128xf32, #tpu.memory_space<vmem>>, vector<64x32xf32>
    %c160 = arith.constant 160 : index
    %c0_6 = arith.constant 0 : index
    %5 = vector.load %arg1[%c160, %c0_6] : memref<240x128xf32, #tpu.memory_space<vmem>>, vector<1x96xf32>
    %c168 = arith.constant 168 : index
    %c0_7 = arith.constant 0 : index
    %6 = vector.load %arg1[%c168, %c0_7] : memref<240x128xf32, #tpu.memory_space<vmem>>, vector<1x32xf32>
    %c176 = arith.constant 176 : index
    %c0_8 = arith.constant 0 : index
    %7 = vector.load %arg1[%c176, %c0_8] : memref<240x128xf32, #tpu.memory_space<vmem>>, vector<1x64xf32>
    %c184 = arith.constant 184 : index
    %c0_9 = arith.constant 0 : index
    %8 = vector.load %arg1[%c184, %c0_9] : memref<240x128xf32, #tpu.memory_space<vmem>>, vector<1x32xf32>
    %c192 = arith.constant 192 : index
    %c0_10 = arith.constant 0 : index
    %9 = vector.load %arg1[%c192, %c0_10] : memref<240x128xf32, #tpu.memory_space<vmem>>, vector<1x32xf32>
    %c200 = arith.constant 200 : index
    %c0_11 = arith.constant 0 : index
    %10 = vector.load %arg1[%c200, %c0_11] : memref<240x128xf32, #tpu.memory_space<vmem>>, vector<1x32xf32>
    %c208 = arith.constant 208 : index
    %c0_12 = arith.constant 0 : index
    %11 = vector.load %arg1[%c208, %c0_12] : memref<240x128xf32, #tpu.memory_space<vmem>>, vector<1x32xf32>
    %c216 = arith.constant 216 : index
    %c0_13 = arith.constant 0 : index
    %12 = vector.load %arg1[%c216, %c0_13] : memref<240x128xf32, #tpu.memory_space<vmem>>, vector<1x32xf32>
    %c224 = arith.constant 224 : index
    %c0_14 = arith.constant 0 : index
    %13 = vector.load %arg1[%c224, %c0_14] : memref<240x128xf32, #tpu.memory_space<vmem>>, vector<16x16xf32>
    %cst = arith.constant dense<0.000000e+00> : vector<16x96xf32>
    %14 = tpu.matmul %0, %1, %cst {dimension_numbers = #tpu.dot_dimension_numbers<[1], [0], [0], [1], [0, 0, 1, 1], [], []>} : vector<16x32xf32>, vector<32x96xf32>, vector<16x96xf32> -> vector<16x96xf32>
    %15 = vector.broadcast %5 : vector<1x96xf32> to vector<16x96xf32>
    %16 = arith.addf %14, %15 : vector<16x96xf32>
    %17 = vector.extract_strided_slice %16 {offsets = [0, 0], sizes = [16, 8], strides = [1, 1]} : vector<16x96xf32> to vector<16x8xf32>
    %18 = vector.extract_strided_slice %16 {offsets = [0, 8], sizes = [16, 8], strides = [1, 1]} : vector<16x96xf32> to vector<16x8xf32>
    %19 = vector.extract_strided_slice %16 {offsets = [0, 16], sizes = [16, 8], strides = [1, 1]} : vector<16x96xf32> to vector<16x8xf32>
    %20 = vector.extract_strided_slice %16 {offsets = [0, 24], sizes = [16, 8], strides = [1, 1]} : vector<16x96xf32> to vector<16x8xf32>
    %21 = vector.shape_cast %17 : vector<16x8xf32> to vector<1x16x8xf32>
    %22 = vector.shape_cast %18 : vector<16x8xf32> to vector<1x16x8xf32>
    %23 = vector.shape_cast %19 : vector<16x8xf32> to vector<1x16x8xf32>
    %24 = vector.shape_cast %20 : vector<16x8xf32> to vector<1x16x8xf32>
    %25 = tpu.concatenate %21, %22, %23, %24 in 0 : vector<1x16x8xf32>, vector<1x16x8xf32>, vector<1x16x8xf32>, vector<1x16x8xf32> -> vector<4x16x8xf32>
    %26 = vector.extract_strided_slice %16 {offsets = [0, 32], sizes = [16, 8], strides = [1, 1]} : vector<16x96xf32> to vector<16x8xf32>
    %27 = vector.extract_strided_slice %16 {offsets = [0, 40], sizes = [16, 8], strides = [1, 1]} : vector<16x96xf32> to vector<16x8xf32>
    %28 = vector.extract_strided_slice %16 {offsets = [0, 48], sizes = [16, 8], strides = [1, 1]} : vector<16x96xf32> to vector<16x8xf32>
    %29 = vector.extract_strided_slice %16 {offsets = [0, 56], sizes = [16, 8], strides = [1, 1]} : vector<16x96xf32> to vector<16x8xf32>
    %30 = vector.shape_cast %26 : vector<16x8xf32> to vector<1x16x8xf32>
    %31 = vector.shape_cast %27 : vector<16x8xf32> to vector<1x16x8xf32>
    %32 = vector.shape_cast %28 : vector<16x8xf32> to vector<1x16x8xf32>
    %33 = vector.shape_cast %29 : vector<16x8xf32> to vector<1x16x8xf32>
    %34 = tpu.concatenate %30, %31, %32, %33 in 0 : vector<1x16x8xf32>, vector<1x16x8xf32>, vector<1x16x8xf32>, vector<1x16x8xf32> -> vector<4x16x8xf32>
    %35 = vector.extract_strided_slice %16 {offsets = [0, 64], sizes = [16, 8], strides = [1, 1]} : vector<16x96xf32> to vector<16x8xf32>
    %36 = vector.extract_strided_slice %16 {offsets = [0, 72], sizes = [16, 8], strides = [1, 1]} : vector<16x96xf32> to vector<16x8xf32>
    %37 = vector.extract_strided_slice %16 {offsets = [0, 80], sizes = [16, 8], strides = [1, 1]} : vector<16x96xf32> to vector<16x8xf32>
    %38 = vector.extract_strided_slice %16 {offsets = [0, 88], sizes = [16, 8], strides = [1, 1]} : vector<16x96xf32> to vector<16x8xf32>
    %39 = vector.shape_cast %35 : vector<16x8xf32> to vector<1x16x8xf32>
    %40 = vector.shape_cast %36 : vector<16x8xf32> to vector<1x16x8xf32>
    %41 = vector.shape_cast %37 : vector<16x8xf32> to vector<1x16x8xf32>
    %42 = vector.shape_cast %38 : vector<16x8xf32> to vector<1x16x8xf32>
    %43 = tpu.concatenate %39, %40, %41, %42 in 0 : vector<1x16x8xf32>, vector<1x16x8xf32>, vector<1x16x8xf32>, vector<1x16x8xf32> -> vector<4x16x8xf32>
    "tpu.trace_start"() <{level = 10 : i32, message = "hqd,hkd->hqk"}> : () -> ()
    %cst_15 = arith.constant dense<0.000000e+00> : vector<4x16x16xf32>
    %44 = tpu.matmul %25, %34, %cst_15 {dimension_numbers = #tpu.dot_dimension_numbers<[2], [2], [1], [1], [0, 0, 0, 1, 1, 1], [0], [0]>} : vector<4x16x8xf32>, vector<4x16x8xf32>, vector<4x16x16xf32> -> vector<4x16x16xf32>
    "tpu.trace_stop"() : () -> ()
    %cst_16 = arith.constant 0.353553385 : f32
    %45 = vector.broadcast %cst_16 : f32 to vector<4x16x16xf32>
    %46 = arith.mulf %44, %45 : vector<4x16x16xf32>
    %47 = vector.shape_cast %13 : vector<16x16xf32> to vector<1x16x16xf32>
    %48 = vector.broadcast %47 : vector<1x16x16xf32> to vector<4x16x16xf32>
    %49 = arith.addf %46, %48 : vector<4x16x16xf32>
    %cst_17 = arith.constant dense<0xFF800000> : vector<4x16xf32>
    %50 = vector.multi_reduction <maximumf>, %49, %cst_17 [2] : vector<4x16x16xf32> to vector<4x16xf32>
    %51 = vector.shape_cast %50 : vector<4x16xf32> to vector<4x16x1xf32>
    %52 = vector.broadcast %51 : vector<4x16x1xf32> to vector<4x16x16xf32>
    %53 = arith.subf %49, %52 : vector<4x16x16xf32>
    %54 = math.exp %53 : vector<4x16x16xf32>
    %cst_18 = arith.constant dense<0.000000e+00> : vector<4x16xf32>
    %55 = vector.multi_reduction <add>, %54, %cst_18 [2] : vector<4x16x16xf32> to vector<4x16xf32>
    %56 = vector.shape_cast %55 : vector<4x16xf32> to vector<4x16x1xf32>
    %57 = tpu.reciprocal %56 {approx = true} : vector<4x16x1xf32> -> vector<4x16x1xf32>
    %58 = vector.broadcast %57 : vector<4x16x1xf32> to vector<4x16x16xf32>
    %59 = arith.mulf %54, %58 : vector<4x16x16xf32>
    "tpu.trace_start"() <{level = 10 : i32, message = "hqk,hkd->hqd"}> : () -> ()
    %cst_19 = arith.constant dense<0.000000e+00> : vector<4x16x8xf32>
    %60 = tpu.matmul %59, %43, %cst_19 {dimension_numbers = #tpu.dot_dimension_numbers<[2], [1], [1], [2], [0, 0, 0, 1, 1, 2], [0], [0]>} : vector<4x16x16xf32>, vector<4x16x8xf32>, vector<4x16x8xf32> -> vector<4x16x8xf32>
    "tpu.trace_stop"() : () -> ()
    %61 = vector.extract_strided_slice %60 {offsets = [0, 0, 0], sizes = [1, 16, 8], strides = [1, 1, 1]} : vector<4x16x8xf32> to vector<1x16x8xf32>
    %62 = vector.shape_cast %61 : vector<1x16x8xf32> to vector<16x8xf32>
    %63 = vector.extract_strided_slice %60 {offsets = [1, 0, 0], sizes = [1, 16, 8], strides = [1, 1, 1]} : vector<4x16x8xf32> to vector<1x16x8xf32>
    %64 = vector.shape_cast %63 : vector<1x16x8xf32> to vector<16x8xf32>
    %65 = vector.extract_strided_slice %60 {offsets = [2, 0, 0], sizes = [1, 16, 8], strides = [1, 1, 1]} : vector<4x16x8xf32> to vector<1x16x8xf32>
    %66 = vector.shape_cast %65 : vector<1x16x8xf32> to vector<16x8xf32>
    %67 = vector.extract_strided_slice %60 {offsets = [3, 0, 0], sizes = [1, 16, 8], strides = [1, 1, 1]} : vector<4x16x8xf32> to vector<1x16x8xf32>
    %68 = vector.shape_cast %67 : vector<1x16x8xf32> to vector<16x8xf32>
    %69 = tpu.concatenate %62, %64, %66, %68 in 1 : vector<16x8xf32>, vector<16x8xf32>, vector<16x8xf32>, vector<16x8xf32> -> vector<16x32xf32>
    %cst_20 = arith.constant dense<0.000000e+00> : vector<16x32xf32>
    %70 = tpu.matmul %69, %2, %cst_20 {dimension_numbers = #tpu.dot_dimension_numbers<[1], [0], [0], [1], [0, 0, 1, 1], [], []>} : vector<16x32xf32>, vector<32x32xf32>, vector<16x32xf32> -> vector<16x32xf32>
    %71 = vector.broadcast %6 : vector<1x32xf32> to vector<16x32xf32>
    %72 = arith.addf %70, %71 : vector<16x32xf32>
    %73 = arith.addf %0, %72 : vector<16x32xf32>
    %cst_21 = arith.constant dense<0.000000e+00> : vector<16xf32>
    %74 = vector.multi_reduction <add>, %73, %cst_21 [1] : vector<16x32xf32> to vector<16xf32>
    %75 = vector.shape_cast %74 : vector<16xf32> to vector<16x1xf32>
    %cst_22 = arith.constant 3.200000e+01 : f32
    %76 = vector.broadcast %cst_22 : f32 to vector<16x1xf32>
    %77 = arith.divf %75, %76 : vector<16x1xf32>
    %78 = vector.broadcast %77 : vector<16x1xf32> to vector<16x32xf32>
    %79 = arith.subf %73, %78 : vector<16x32xf32>
    %80 = arith.mulf %79, %79 : vector<16x32xf32>
    %cst_23 = arith.constant dense<0.000000e+00> : vector<16xf32>
    %81 = vector.multi_reduction <add>, %80, %cst_23 [1] : vector<16x32xf32> to vector<16xf32>
    %82 = vector.shape_cast %81 : vector<16xf32> to vector<16x1xf32>
    %cst_24 = arith.constant 3.200000e+01 : f32
    %83 = vector.broadcast %cst_24 : f32 to vector<16x1xf32>
    %84 = arith.divf %82, %83 : vector<16x1xf32>
    %85 = vector.broadcast %77 : vector<16x1xf32> to vector<16x32xf32>
    %86 = arith.subf %73, %85 : vector<16x32xf32>
    %cst_25 = arith.constant 9.99999974E-6 : f32
    %87 = vector.broadcast %cst_25 : f32 to vector<16x1xf32>
    %88 = arith.addf %84, %87 : vector<16x1xf32>
    %89 = math.rsqrt %88 : vector<16x1xf32>
    %90 = vector.broadcast %89 : vector<16x1xf32> to vector<16x32xf32>
    %91 = arith.mulf %86, %90 : vector<16x32xf32>
    %92 = vector.broadcast %9 : vector<1x32xf32> to vector<16x32xf32>
    %93 = arith.mulf %91, %92 : vector<16x32xf32>
    %94 = vector.broadcast %10 : vector<1x32xf32> to vector<16x32xf32>
    %95 = arith.addf %93, %94 : vector<16x32xf32>
    %cst_26 = arith.constant dense<0.000000e+00> : vector<16x64xf32>
    %96 = tpu.matmul %95, %3, %cst_26 {dimension_numbers = #tpu.dot_dimension_numbers<[1], [0], [0], [1], [0, 0, 1, 1], [], []>} : vector<16x32xf32>, vector<32x64xf32>, vector<16x64xf32> -> vector<16x64xf32>
    %97 = vector.broadcast %7 : vector<1x64xf32> to vector<16x64xf32>
    %98 = arith.addf %96, %97 : vector<16x64xf32>
    %cst_27 = arith.constant 0.000000e+00 : f32
    %99 = vector.broadcast %cst_27 : f32 to vector<16x64xf32>
    %100 = arith.maximumf %98, %99 : vector<16x64xf32>
    %cst_28 = arith.constant dense<0.000000e+00> : vector<16x32xf32>
    %101 = tpu.matmul %100, %4, %cst_28 {dimension_numbers = #tpu.dot_dimension_numbers<[1], [0], [0], [1], [0, 0, 1, 1], [], []>} : vector<16x64xf32>, vector<64x32xf32>, vector<16x32xf32> -> vector<16x32xf32>
    %102 = vector.broadcast %8 : vector<1x32xf32> to vector<16x32xf32>
    %103 = arith.addf %101, %102 : vector<16x32xf32>
    %104 = arith.addf %95, %103 : vector<16x32xf32>
    %cst_29 = arith.constant dense<0.000000e+00> : vector<16xf32>
    %105 = vector.multi_reduction <add>, %104, %cst_29 [1] : vector<16x32xf32> to vector<16xf32>
    %106 = vector.shape_cast %105 : vector<16xf32> to vector<16x1xf32>
    %cst_30 = arith.constant 3.200000e+01 : f32
    %107 = vector.broadcast %cst_30 : f32 to vector<16x1xf32>
    %108 = arith.divf %106, %107 : vector<16x1xf32>
    %109 = vector.broadcast %108 : vector<16x1xf32> to vector<16x32xf32>
    %110 = arith.subf %104, %109 : vector<16x32xf32>
    %111 = arith.mulf %110, %110 : vector<16x32xf32>
    %cst_31 = arith.constant dense<0.000000e+00> : vector<16xf32>
    %112 = vector.multi_reduction <add>, %111, %cst_31 [1] : vector<16x32xf32> to vector<16xf32>
    %113 = vector.shape_cast %112 : vector<16xf32> to vector<16x1xf32>
    %cst_32 = arith.constant 3.200000e+01 : f32
    %114 = vector.broadcast %cst_32 : f32 to vector<16x1xf32>
    %115 = arith.divf %113, %114 : vector<16x1xf32>
    %116 = vector.broadcast %108 : vector<16x1xf32> to vector<16x32xf32>
    %117 = arith.subf %104, %116 : vector<16x32xf32>
    %cst_33 = arith.constant 9.99999974E-6 : f32
    %118 = vector.broadcast %cst_33 : f32 to vector<16x1xf32>
    %119 = arith.addf %115, %118 : vector<16x1xf32>
    %120 = math.rsqrt %119 : vector<16x1xf32>
    %121 = vector.broadcast %120 : vector<16x1xf32> to vector<16x32xf32>
    %122 = arith.mulf %117, %121 : vector<16x32xf32>
    %123 = vector.broadcast %11 : vector<1x32xf32> to vector<16x32xf32>
    %124 = arith.mulf %122, %123 : vector<16x32xf32>
    %125 = vector.broadcast %12 : vector<1x32xf32> to vector<16x32xf32>
    %126 = arith.addf %124, %125 : vector<16x32xf32>
    %c0_34 = arith.constant 0 : index
    %c0_35 = arith.constant 0 : index
    %127 = vector.load %arg2[%c0_34, %c0_35] : memref<16x32xf32, #tpu.memory_space<vmem>>, vector<16x32xf32>
    tpu.vector_store %arg2[%c0_34, %c0_35], %126 {strides = array<i32>} : memref<16x32xf32, #tpu.memory_space<vmem>>, vector<16x32xf32>,
    return
  }
}

</mosaic_0001>

<llo_original>
// kernel: transformer_encoder_layer.1
$region0: #{transformer_encoder_layer.1}
  #allocation0 [shape = 'u32[]', space=smem, size = 0x4, offset = 0x4, fixed_abs, tag = 'smem constant byte address 0x4 - core index']
  #allocation1 [shape = 'u32[144,128]{1,0:T(1,128)}', space=vmem, size = 0x12000, scoped, tag = 'internal scratch']
  %s0 = inlined_call_operand.hbm [shape: f32[16,32], index: 0, kind: input, shape index: {}]
  %s1 = inlined_call_operand.hbm [shape: f32[240,128], index: 1, kind: input, shape index: {}]
  %s2 = inlined_call_operand.hbm [shape: f32[16,32], index: 2, kind: output, shape index: {}]
  %s3 = sld [smem:[#allocation0]]
  $region26: #{transformer_encoder_layer.1} parent=0
    _
  %s5 = ssub.s32 1, %s3
  %s6 = scalar_select 0, %s5, %s3
  $region1: #{transformer_encoder_layer.1} parent=0
    #allocation2 [shape = 'u8[8192]{0}', space=vmem, size = 0x2000, scoped, tag = 'input window, operand 0, single buffered']
    #allocation3 [shape = 's32[1]{0}', space=sflag, size = 0x4, scoped, tag = 'scoped memory for transformer_encoder_layer.1']
    #allocation4 [shape = 's32[1]{0}', space=sflag, size = 0x4, scoped, tag = 'scoped memory for transformer_encoder_layer.1']
    #allocation5 [shape = 'u8[122880]{0}', space=vmem, size = 0x1e000, scoped, tag = 'input window, operand 1, single buffered']
    #allocation6 [shape = 's32[1]{0}', space=sflag, size = 0x4, scoped, tag = 'scoped memory for transformer_encoder_layer.1']
    #allocation7 [shape = 'u8[8192]{0}', space=vmem, size = 0x2000, scoped, tag = 'output window, operand 0, single buffered']
    %7 = vsyncpa [#allocation3], 0
    %8 = vsyncpa [#allocation6], 0
    %9 = vsyncpa [#allocation4], 0
    // Predicated region
    $region2: #{transformer_encoder_layer.1} parent=1 // pred_check
      _
    $region3: #{transformer_encoder_layer.1} parent=1 // pred_check_branch
      %11 = sbr.rel (0) target = $region5
    $region4: #{transformer_encoder_layer.1} parent=1 // pred_region
      %s13 = ssub.s32 256, 256
      %14 = vsyncadd [#allocation3], %s13
      %s15 = sshll.u32 [#allocation2], 4
      %s16 = int_to_ptr.vmem [resolvable:$true] %s15
      %21 = dma.hbm_to_vmem [thread:$0]  %s0, 256, %s16, [#allocation3], 128, 128, 8
    $region5: #{transformer_encoder_layer.1} parent=1 // pred_fallthru
      _
    // Predicated region
    $region6: #{transformer_encoder_layer.1} parent=1 // pred_check
      _
    $region7: #{transformer_encoder_layer.1} parent=1 // pred_check_branch
      %23 = sbr.rel (0) target = $region9
    $region8: #{transformer_encoder_layer.1} parent=1 // pred_region
      %s25 = ssub.s32 3840, 3840
      %26 = vsyncadd [#allocation6], %s25
      %s27 = sshll.u32 [#allocation5], 4
      %s28 = int_to_ptr.vmem [resolvable:$true] %s27
      %33 = dma.hbm_to_vmem [thread:$0]  %s1, 3840, %s28, [#allocation6], 128, 128, 8
    $region9: #{transformer_encoder_layer.1} parent=1 // pred_fallthru
      _
    // Predicated region
    $region10: #{transformer_encoder_layer.1} parent=1 // pred_check
      _
    $region11: #{transformer_encoder_layer.1} parent=1 // pred_check_branch
      %35 = sbr.rel (0) target = $region13
    $region12: #{transformer_encoder_layer.1} parent=1 // pred_region
      %36 = dma.done [#allocation3], 256
    $region13: #{transformer_encoder_layer.1} parent=1 // pred_fallthru
      _
    // Predicated region
    $region14: #{transformer_encoder_layer.1} parent=1 // pred_check
      _
    $region15: #{transformer_encoder_layer.1} parent=1 // pred_check_branch
      %38 = sbr.rel (0) target = $region17
    $region16: #{transformer_encoder_layer.1} parent=1 // pred_region
      %39 = dma.done [#allocation6], 3840
    $region17: #{transformer_encoder_layer.1} parent=1 // pred_fallthru
      _
    %v40 = vld [vmem:[#allocation2] sm:$0xff]
    %v41 = vld [vmem:[#allocation2 + $0x8] sm:$0xff]
    %v42 = vld [vmem:[#allocation5] sm:$0xff]
    %v43 = vld [vmem:[#allocation5 + $0x8] sm:$0xff]
    %v44 = vld [vmem:[#allocation5 + $0x10] sm:$0xff]
    %v45 = vld [vmem:[#allocation5 + $0x18] sm:$0xff]
    %v46 = vld [vmem:[#allocation5 + $0x20] sm:$0xff]
    %v47 = vld [vmem:[#allocation5 + $0x28] sm:$0xff]
    %v48 = vld [vmem:[#allocation5 + $0x30] sm:$0xff]
    %v49 = vld [vmem:[#allocation5 + $0x38] sm:$0xff]
    %v50 = vld [vmem:[#allocation5 + $0x40] sm:$0xff]
    %v51 = vld [vmem:[#allocation5 + $0x48] sm:$0xff]
    %v52 = vld [vmem:[#allocation5 + $0x50] sm:$0xff]
    %v53 = vld [vmem:[#allocation5 + $0x58] sm:$0xff]
    %v54 = vld [vmem:[#allocation5 + $0x60] sm:$0xff]
    %v55 = vld [vmem:[#allocation5 + $0x68] sm:$0xff]
    %v56 = vld [vmem:[#allocation5 + $0x70] sm:$0xff]
    %v57 = vld [vmem:[#allocation5 + $0x78] sm:$0xff]
    %v58 = vld [vmem:[#allocation5 + $0x80] sm:$0xff]
    %v59 = vld [vmem:[#allocation5 + $0x88] sm:$0xff]
    %v60 = vld [vmem:[#allocation5 + $0x90] sm:$0xff]
    %v61 = vld [vmem:[#allocation5 + $0x98] sm:$0xff]
    %v62 = vld [vmem:[#allocation5 + $0xa0] sm:$0x1]
    %v63 = vld [vmem:[#allocation5 + $0xa8] sm:$0x1]
    %v64 = vld [vmem:[#allocation5 + $0xb0] sm:$0x1]
    %v65 = vld [vmem:[#allocation5 + $0xb8] sm:$0x1]
    %v66 = vld [vmem:[#allocation5 + $0xc0] sm:$0x1]
    %v67 = vld [vmem:[#allocation5 + $0xc8] sm:$0x1]
    %v68 = vld [vmem:[#allocation5 + $0xd0] sm:$0x1]
    %v69 = vld [vmem:[#allocation5 + $0xd8] sm:$0x1]
    %v70 = vld [vmem:[#allocation5 + $0xe0] sm:$0xff]
    %v71 = vld [vmem:[#allocation5 + $0xe8] sm:$0xff]
    %v72 = vlaneseq
    %v73 = vshrl.u32 %v72, 7
    %v74 = vsub.s32 0, %v73
    %v75 = vrot.slane %v62, %v74
    %vm76 = vcmask 261120
    %v78 = vsel %vm76, %v40, 0
    %v81 = vsel %vm76, %v41, 0
    %83 = vmatprep.subr.mxu0 0.0
    %84 = vmatpush1.msra.mxu0 0.0
    %85 = vmatprep.subr.mxu0 0.0
    %86 = vmatpush1.msra.mxu0 0.0
    %87 = vmatprep.subr.mxu0 0.0
    %88 = vmatpush1.msra.mxu0 0.0
    %89 = vmatprep.subr.mxu0 0.0
    %90 = vmatpush1.msra.mxu0 0.0
    %91 = vmatprep.subr.mxu0 0.0
    %92 = vmatpush1.msra.mxu0 0.0
    %93 = vmatprep.subr.mxu0 0.0
    %94 = vmatpush1.msra.mxu0 0.0
    %95 = vmatprep.subr.mxu0 0.0
    %96 = vmatpush1.msra.mxu0 0.0
    %97 = vmatprep.subr.mxu0 0.0
    %98 = vmatpush1.msra.mxu0 0.0
    %99 = vmatprep.subr.mxu0 0.0
    %100 = vmatpush1.msra.mxu0 0.0
    %101 = vmatprep.subr.mxu0 0.0
    %102 = vmatpush1.msra.mxu0 0.0
    %103 = vmatprep.subr.mxu0 0.0
    %104 = vmatpush1.msra.mxu0 0.0
    %105 = vmatprep.subr.mxu0 0.0
    %106 = vmatpush1.msra.mxu0 0.0
    %107 = vmatprep.subr.mxu0 0.0
    %108 = vmatpush1.msra.mxu0 %v45
    %109 = vmatprep.subr.mxu0 0.0
    %110 = vmatpush1.msra.mxu0 %v44
    %111 = vmatprep.subr.mxu0 0.0
    %112 = vmatpush1.msra.mxu0 %v43
    %113 = vmatprep.subr.mxu0 0.0
    %114 = vmatpush1.msra.mxu0 %v42
    %115 = vmatprep.subr.mxu0 0.0
    %116 = vmatpush2.msra.mxu0 0.0
    %117 = vmatprep.subr.mxu0 0.0
    %118 = vmatpush2.msra.mxu0 0.0
    %119 = vmatprep.subr.mxu0 0.0
    %120 = vmatpush2.msra.mxu0 0.0
    %121 = vmatprep.subr.mxu0 0.0
    %122 = vmatpush2.msra.mxu0 0.0
    %123 = vmatprep.subr.mxu0 0.0
    %124 = vmatpush2.msra.mxu0 0.0
    %125 = vmatprep.subr.mxu0 0.0
    %126 = vmatpush2.msra.mxu0 0.0
    %127 = vmatprep.subr.mxu0 0.0
    %128 = vmatpush2.msra.mxu0 0.0
    %129 = vmatprep.subr.mxu0 0.0
    %130 = vmatpush2.msra.mxu0 0.0
    %131 = vmatprep.subr.mxu0 0.0
    %132 = vmatpush2.msra.mxu0 0.0
    %133 = vmatprep.subr.mxu0 0.0
    %134 = vmatpush2.msra.mxu0 0.0
    %135 = vmatprep.subr.mxu0 0.0
    %136 = vmatpush2.msra.mxu0 0.0
    %137 = vmatprep.subr.mxu0 0.0
    %138 = vmatpush2.msra.mxu0 0.0
    %139 = vmatprep.subr.mxu0 0.0
    %140 = vmatpush2.msra.mxu0 0.0
    %141 = vmatprep.subr.mxu0 0.0
    %142 = vmatpush2.msra.mxu0 0.0
    %143 = vmatprep.subr.mxu0 0.0
    %144 = vmatpush2.msra.mxu0 0.0
    %145 = vmatprep.subr.mxu0 0.0
    %146 = vmatpush2.msra.mxu0 0.0
    %147 = vmatprep.mubr.f32.mxu0 0.0
    %148 = vmatmul.mubr.f32.gmra.mxu0 %v78
    %v149 = vpop.f32.mrf.mxu0
    %v150 = vadd.f32 %v75, %v149
    %v151 = vpop.f32.mrf.mxu0
    %152 = vmatprep.mubr.f32.mxu0 0.0
    %153 = vmatmul.mubr.f32.gmra.mxu0 %v81
    %v154 = vpop.f32.mrf.mxu0
    %v155 = vadd.f32 %v75, %v154
    %v156 = vpop.f32.mrf.mxu0
    %157 = vdwg.mxu0
    %160 = vrot.lane.b32.xlu0 %v150, 120
    %v161 = vpop.permute.xlu0 %160
    %162 = vrot.lane.b32.xlu0 %v155, 120
    %v163 = vpop.permute.xlu0 %162
    %164 = vrot.lane.b32.xlu0 %v150, 112
    %v165 = vpop.permute.xlu0 %164
    %166 = vrot.lane.b32.xlu0 %v155, 112
    %v167 = vpop.permute.xlu0 %166
    %168 = vrot.lane.b32.xlu0 %v150, 104
    %v169 = vpop.permute.xlu0 %168
    %170 = vrot.lane.b32.xlu0 %v155, 104
    %v171 = vpop.permute.xlu0 %170
    %172 = vrot.lane.b32.xlu0 %v150, 96
    %v173 = vpop.permute.xlu0 %172
    %174 = vrot.lane.b32.xlu0 %v155, 96
    %v175 = vpop.permute.xlu0 %174
    %vm176 = vcmask 64512
    %v177 = vsel %vm176, %v150, 0
    %v179 = vsel %vm176, %v155, 0
    %v181 = vsel %vm176, %v173, 0
    %v183 = vsel %vm176, %v175, 0
    %185 = vmatprep.subr.mxu0 0.0
    %186 = vmatpush1.xpose.msra.mxu0 0.0
    %187 = vmatprep.subr.mxu0 0.0
    %188 = vmatpush1.xpose.msra.mxu0 0.0
    %189 = vmatprep.subr.mxu0 0.0
    %190 = vmatpush1.xpose.msra.mxu0 0.0
    %191 = vmatprep.subr.mxu0 0.0
    %192 = vmatpush1.xpose.msra.mxu0 0.0
    %193 = vmatprep.subr.mxu0 0.0
    %194 = vmatpush1.xpose.msra.mxu0 0.0
    %195 = vmatprep.subr.mxu0 0.0
    %196 = vmatpush1.xpose.msra.mxu0 0.0
    %197 = vmatprep.subr.mxu0 0.0
    %198 = vmatpush1.xpose.msra.mxu0 0.0
    %199 = vmatprep.subr.mxu0 0.0
    %200 = vmatpush1.xpose.msra.mxu0 0.0
    %201 = vmatprep.subr.mxu0 0.0
    %202 = vmatpush1.xpose.msra.mxu0 0.0
    %203 = vmatprep.subr.mxu0 0.0
    %204 = vmatpush1.xpose.msra.mxu0 0.0
    %205 = vmatprep.subr.mxu0 0.0
    %206 = vmatpush1.xpose.msra.mxu0 0.0
    %207 = vmatprep.subr.mxu0 0.0
    %208 = vmatpush1.xpose.msra.mxu0 0.0
    %209 = vmatprep.subr.mxu0 0.0
    %210 = vmatpush1.xpose.msra.mxu0 0.0
    %211 = vmatprep.subr.mxu0 0.0
    %212 = vmatpush1.xpose.msra.mxu0 0.0
    %213 = vmatprep.subr.mxu0 0.0
    %214 = vmatpush1.xpose.msra.mxu0 %v183
    %215 = vmatprep.subr.mxu0 0.0
    %216 = vmatpush1.xpose.msra.mxu0 %v181
    %217 = vmatprep.subr.mxu0 0.0
    %218 = vmatpush2.xpose.msra.mxu0 0.0
    %219 = vmatprep.subr.mxu0 0.0
    %220 = vmatpush2.xpose.msra.mxu0 0.0
    %221 = vmatprep.subr.mxu0 0.0
    %222 = vmatpush2.xpose.msra.mxu0 0.0
    %223 = vmatprep.subr.mxu0 0.0
    %224 = vmatpush2.xpose.msra.mxu0 0.0
    %225 = vmatprep.subr.mxu0 0.0
    %226 = vmatpush2.xpose.msra.mxu0 0.0
    %227 = vmatprep.subr.mxu0 0.0
    %228 = vmatpush2.xpose.msra.mxu0 0.0
    %229 = vmatprep.subr.mxu0 0.0
    %230 = vmatpush2.xpose.msra.mxu0 0.0
    %231 = vmatprep.subr.mxu0 0.0
    %232 = vmatpush2.xpose.msra.mxu0 0.0
    %233 = vmatprep.subr.mxu0 0.0
    %234 = vmatpush2.xpose.msra.mxu0 0.0
    %235 = vmatprep.subr.mxu0 0.0
    %236 = vmatpush2.xpose.msra.mxu0 0.0
    %237 = vmatprep.subr.mxu0 0.0
    %238 = vmatpush2.xpose.msra.mxu0 0.0
    %239 = vmatprep.subr.mxu0 0.0
    %240 = vmatpush2.xpose.msra.mxu0 0.0
    %241 = vmatprep.subr.mxu0 0.0
    %242 = vmatpush2.xpose.msra.mxu0 0.0
    %243 = vmatprep.subr.mxu0 0.0
    %244 = vmatpush2.xpose.msra.mxu0 0.0
    %245 = vmatprep.subr.mxu0 0.0
    %246 = vmatpush2.xpose.msra.mxu0 0.0
    %247 = vmatprep.subr.mxu0 0.0
    %248 = vmatpush2.xpose.msra.mxu0 0.0
    %249 = vmatprep.mubr.f32.mxu0 0.0
    %250 = vmatmul.mubr.f32.gmra.mxu0 %v177
    %v251 = vpop.f32.mrf.mxu0
    %v252 = vadd.f32 0.0, %v251
    %v253 = vpop.f32.mrf.mxu0
    %254 = vmatprep.mubr.f32.mxu0 0.0
    %255 = vmatmul.mubr.f32.gmra.mxu0 %v179
    %v256 = vpop.f32.mrf.mxu0
    %v257 = vadd.f32 0.0, %v256
    %v258 = vpop.f32.mrf.mxu0
    %259 = vdwg.mxu0
    %260 = vrot.lane.b32.xlu0 %v161, 96
    %v261 = vpop.permute.xlu0 %260
    %262 = vrot.lane.b32.xlu0 %v163, 96
    %v263 = vpop.permute.xlu0 %262
    %v264 = vsel %vm176, %v161, 0
    %v266 = vsel %vm176, %v163, 0
    %v268 = vsel %vm176, %v261, 0
    %v270 = vsel %vm176, %v263, 0
    %272 = vmatprep.subr.mxu0 0.0
    %273 = vmatpush1.xpose.msra.mxu0 0.0
    %274 = vmatprep.subr.mxu0 0.0
    %275 = vmatpush1.xpose.msra.mxu0 0.0
    %276 = vmatprep.subr.mxu0 0.0
    %277 = vmatpush1.xpose.msra.mxu0 0.0
    %278 = vmatprep.subr.mxu0 0.0
    %279 = vmatpush1.xpose.msra.mxu0 0.0
    %280 = vmatprep.subr.mxu0 0.0
    %281 = vmatpush1.xpose.msra.mxu0 0.0
    %282 = vmatprep.subr.mxu0 0.0
    %283 = vmatpush1.xpose.msra.mxu0 0.0
    %284 = vmatprep.subr.mxu0 0.0
    %285 = vmatpush1.xpose.msra.mxu0 0.0
    %286 = vmatprep.subr.mxu0 0.0
    %287 = vmatpush1.xpose.msra.mxu0 0.0
    %288 = vmatprep.subr.mxu0 0.0
    %289 = vmatpush1.xpose.msra.mxu0 0.0
    %290 = vmatprep.subr.mxu0 0.0
    %291 = vmatpush1.xpose.msra.mxu0 0.0
    %292 = vmatprep.subr.mxu0 0.0
    %293 = vmatpush1.xpose.msra.mxu0 0.0
    %294 = vmatprep.subr.mxu0 0.0
    %295 = vmatpush1.xpose.msra.mxu0 0.0
    %296 = vmatprep.subr.mxu0 0.0
    %297 = vmatpush1.xpose.msra.mxu0 0.0
    %298 = vmatprep.subr.mxu0 0.0
    %299 = vmatpush1.xpose.msra.mxu0 0.0
    %300 = vmatprep.subr.mxu0 0.0
    %301 = vmatpush1.xpose.msra.mxu0 %v270
    %302 = vmatprep.subr.mxu0 0.0
    %303 = vmatpush1.xpose.msra.mxu0 %v268
    %304 = vmatprep.subr.mxu0 0.0
    %305 = vmatpush2.xpose.msra.mxu0 0.0
    %306 = vmatprep.subr.mxu0 0.0
    %307 = vmatpush2.xpose.msra.mxu0 0.0
    %308 = vmatprep.subr.mxu0 0.0
    %309 = vmatpush2.xpose.msra.mxu0 0.0
    %310 = vmatprep.subr.mxu0 0.0
    %311 = vmatpush2.xpose.msra.mxu0 0.0
    %312 = vmatprep.subr.mxu0 0.0
    %313 = vmatpush2.xpose.msra.mxu0 0.0
    %314 = vmatprep.subr.mxu0 0.0
    %315 = vmatpush2.xpose.msra.mxu0 0.0
    %316 = vmatprep.subr.mxu0 0.0
    %317 = vmatpush2.xpose.msra.mxu0 0.0
    %318 = vmatprep.subr.mxu0 0.0
    %319 = vmatpush2.xpose.msra.mxu0 0.0
    %320 = vmatprep.subr.mxu0 0.0
    %321 = vmatpush2.xpose.msra.mxu0 0.0
    %322 = vmatprep.subr.mxu0 0.0
    %323 = vmatpush2.xpose.msra.mxu0 0.0
    %324 = vmatprep.subr.mxu0 0.0
    %325 = vmatpush2.xpose.msra.mxu0 0.0
    %326 = vmatprep.subr.mxu0 0.0
    %327 = vmatpush2.xpose.msra.mxu0 0.0
    %328 = vmatprep.subr.mxu0 0.0
    %329 = vmatpush2.xpose.msra.mxu0 0.0
    %330 = vmatprep.subr.mxu0 0.0
    %331 = vmatpush2.xpose.msra.mxu0 0.0
    %332 = vmatprep.subr.mxu0 0.0
    %333 = vmatpush2.xpose.msra.mxu0 0.0
    %334 = vmatprep.subr.mxu0 0.0
    %335 = vmatpush2.xpose.msra.mxu0 0.0
    %336 = vmatprep.mubr.f32.mxu0 0.0
    %337 = vmatmul.mubr.f32.gmra.mxu0 %v264
    %v338 = vpop.f32.mrf.mxu0
    %v339 = vadd.f32 0.0, %v338
    %v340 = vpop.f32.mrf.mxu0
    %341 = vmatprep.mubr.f32.mxu0 0.0
    %342 = vmatmul.mubr.f32.gmra.mxu0 %v266
    %v343 = vpop.f32.mrf.mxu0
    %v344 = vadd.f32 0.0, %v343
    %v345 = vpop.f32.mrf.mxu0
    %346 = vdwg.mxu0
    %347 = vrot.lane.b32.xlu0 %v165, 96
    %v348 = vpop.permute.xlu0 %347
    %349 = vrot.lane.b32.xlu0 %v167, 96
    %v350 = vpop.permute.xlu0 %349
    %v351 = vsel %vm176, %v165, 0
    %v353 = vsel %vm176, %v167, 0
    %v355 = vsel %vm176, %v348, 0
    %v357 = vsel %vm176, %v350, 0
    %359 = vmatprep.subr.mxu0 0.0
    %360 = vmatpush1.xpose.msra.mxu0 0.0
    %361 = vmatprep.subr.mxu0 0.0
    %362 = vmatpush1.xpose.msra.mxu0 0.0
    %363 = vmatprep.subr.mxu0 0.0
    %364 = vmatpush1.xpose.msra.mxu0 0.0
    %365 = vmatprep.subr.mxu0 0.0
    %366 = vmatpush1.xpose.msra.mxu0 0.0
    %367 = vmatprep.subr.mxu0 0.0
    %368 = vmatpush1.xpose.msra.mxu0 0.0
    %369 = vmatprep.subr.mxu0 0.0
    %370 = vmatpush1.xpose.msra.mxu0 0.0
    %371 = vmatprep.subr.mxu0 0.0
    %372 = vmatpush1.xpose.msra.mxu0 0.0
    %373 = vmatprep.subr.mxu0 0.0
    %374 = vmatpush1.xpose.msra.mxu0 0.0
    %375 = vmatprep.subr.mxu0 0.0
    %376 = vmatpush1.xpose.msra.mxu0 0.0
    %377 = vmatprep.subr.mxu0 0.0
    %378 = vmatpush1.xpose.msra.mxu0 0.0
    %379 = vmatprep.subr.mxu0 0.0
    %380 = vmatpush1.xpose.msra.mxu0 0.0
    %381 = vmatprep.subr.mxu0 0.0
    %382 = vmatpush1.xpose.msra.mxu0 0.0
    %383 = vmatprep.subr.mxu0 0.0
    %384 = vmatpush1.xpose.msra.mxu0 0.0
    %385 = vmatprep.subr.mxu0 0.0
    %386 = vmatpush1.xpose.msra.mxu0 0.0
    %387 = vmatprep.subr.mxu0 0.0
    %388 = vmatpush1.xpose.msra.mxu0 %v357
    %389 = vmatprep.subr.mxu0 0.0
    %390 = vmatpush1.xpose.msra.mxu0 %v355
    %391 = vmatprep.subr.mxu0 0.0
    %392 = vmatpush2.xpose.msra.mxu0 0.0
    %393 = vmatprep.subr.mxu0 0.0
    %394 = vmatpush2.xpose.msra.mxu0 0.0
    %395 = vmatprep.subr.mxu0 0.0
    %396 = vmatpush2.xpose.msra.mxu0 0.0
    %397 = vmatprep.subr.mxu0 0.0
    %398 = vmatpush2.xpose.msra.mxu0 0.0
    %399 = vmatprep.subr.mxu0 0.0
    %400 = vmatpush2.xpose.msra.mxu0 0.0
    %401 = vmatprep.subr.mxu0 0.0
    %402 = vmatpush2.xpose.msra.mxu0 0.0
    %403 = vmatprep.subr.mxu0 0.0
    %404 = vmatpush2.xpose.msra.mxu0 0.0
    %405 = vmatprep.subr.mxu0 0.0
    %406 = vmatpush2.xpose.msra.mxu0 0.0
    %407 = vmatprep.subr.mxu0 0.0
    %408 = vmatpush2.xpose.msra.mxu0 0.0
    %409 = vmatprep.subr.mxu0 0.0
    %410 = vmatpush2.xpose.msra.mxu0 0.0
    %411 = vmatprep.subr.mxu0 0.0
    %412 = vmatpush2.xpose.msra.mxu0 0.0
    %413 = vmatprep.subr.mxu0 0.0
    %414 = vmatpush2.xpose.msra.mxu0 0.0
    %415 = vmatprep.subr.mxu0 0.0
    %416 = vmatpush2.xpose.msra.mxu0 0.0
    %417 = vmatprep.subr.mxu0 0.0
    %418 = vmatpush2.xpose.msra.mxu0 0.0
    %419 = vmatprep.subr.mxu0 0.0
    %420 = vmatpush2.xpose.msra.mxu0 0.0
    %421 = vmatprep.subr.mxu0 0.0
    %422 = vmatpush2.xpose.msra.mxu0 0.0
    %423 = vmatprep.mubr.f32.mxu0 0.0
    %424 = vmatmul.mubr.f32.gmra.mxu0 %v351
    %v425 = vpop.f32.mrf.mxu0
    %v426 = vadd.f32 0.0, %v425
    %v427 = vpop.f32.mrf.mxu0
    %428 = vmatprep.mubr.f32.mxu0 0.0
    %429 = vmatmul.mubr.f32.gmra.mxu0 %v353
    %v430 = vpop.f32.mrf.mxu0
    %v431 = vadd.f32 0.0, %v430
    %v432 = vpop.f32.mrf.mxu0
    %433 = vdwg.mxu0
    %434 = vrot.lane.b32.xlu0 %v169, 96
    %v435 = vpop.permute.xlu0 %434
    %436 = vrot.lane.b32.xlu0 %v171, 96
    %v437 = vpop.permute.xlu0 %436
    %v438 = vsel %vm176, %v169, 0
    %v440 = vsel %vm176, %v171, 0
    %v442 = vsel %vm176, %v435, 0
    %v444 = vsel %vm176, %v437, 0
    %446 = vmatprep.subr.mxu0 0.0
    %447 = vmatpush1.xpose.msra.mxu0 0.0
    %448 = vmatprep.subr.mxu0 0.0
    %449 = vmatpush1.xpose.msra.mxu0 0.0
    %450 = vmatprep.subr.mxu0 0.0
    %451 = vmatpush1.xpose.msra.mxu0 0.0
    %452 = vmatprep.subr.mxu0 0.0
    %453 = vmatpush1.xpose.msra.mxu0 0.0
    %454 = vmatprep.subr.mxu0 0.0
    %455 = vmatpush1.xpose.msra.mxu0 0.0
    %456 = vmatprep.subr.mxu0 0.0
    %457 = vmatpush1.xpose.msra.mxu0 0.0
    %458 = vmatprep.subr.mxu0 0.0
    %459 = vmatpush1.xpose.msra.mxu0 0.0
    %460 = vmatprep.subr.mxu0 0.0
    %461 = vmatpush1.xpose.msra.mxu0 0.0
    %462 = vmatprep.subr.mxu0 0.0
    %463 = vmatpush1.xpose.msra.mxu0 0.0
    %464 = vmatprep.subr.mxu0 0.0
    %465 = vmatpush1.xpose.msra.mxu0 0.0
    %466 = vmatprep.subr.mxu0 0.0
    %467 = vmatpush1.xpose.msra.mxu0 0.0
    %468 = vmatprep.subr.mxu0 0.0
    %469 = vmatpush1.xpose.msra.mxu0 0.0
    %470 = vmatprep.subr.mxu0 0.0
    %471 = vmatpush1.xpose.msra.mxu0 0.0
    %472 = vmatprep.subr.mxu0 0.0
    %473 = vmatpush1.xpose.msra.mxu0 0.0
    %474 = vmatprep.subr.mxu0 0.0
    %475 = vmatpush1.xpose.msra.mxu0 %v444
    %476 = vmatprep.subr.mxu0 0.0
    %477 = vmatpush1.xpose.msra.mxu0 %v442
    %478 = vmatprep.subr.mxu0 0.0
    %479 = vmatpush2.xpose.msra.mxu0 0.0
    %480 = vmatprep.subr.mxu0 0.0
    %481 = vmatpush2.xpose.msra.mxu0 0.0
    %482 = vmatprep.subr.mxu0 0.0
    %483 = vmatpush2.xpose.msra.mxu0 0.0
    %484 = vmatprep.subr.mxu0 0.0
    %485 = vmatpush2.xpose.msra.mxu0 0.0
    %486 = vmatprep.subr.mxu0 0.0
    %487 = vmatpush2.xpose.msra.mxu0 0.0
    %488 = vmatprep.subr.mxu0 0.0
    %489 = vmatpush2.xpose.msra.mxu0 0.0
    %490 = vmatprep.subr.mxu0 0.0
    %491 = vmatpush2.xpose.msra.mxu0 0.0
    %492 = vmatprep.subr.mxu0 0.0
    %493 = vmatpush2.xpose.msra.mxu0 0.0
    %494 = vmatprep.subr.mxu0 0.0
    %495 = vmatpush2.xpose.msra.mxu0 0.0
    %496 = vmatprep.subr.mxu0 0.0
    %497 = vmatpush2.xpose.msra.mxu0 0.0
    %498 = vmatprep.subr.mxu0 0.0
    %499 = vmatpush2.xpose.msra.mxu0 0.0
    %500 = vmatprep.subr.mxu0 0.0
    %501 = vmatpush2.xpose.msra.mxu0 0.0
    %502 = vmatprep.subr.mxu0 0.0
    %503 = vmatpush2.xpose.msra.mxu0 0.0
    %504 = vmatprep.subr.mxu0 0.0
    %505 = vmatpush2.xpose.msra.mxu0 0.0
    %506 = vmatprep.subr.mxu0 0.0
    %507 = vmatpush2.xpose.msra.mxu0 0.0
    %508 = vmatprep.subr.mxu0 0.0
    %509 = vmatpush2.xpose.msra.mxu0 0.0
    %510 = vmatprep.mubr.f32.mxu0 0.0
    %511 = vmatmul.mubr.f32.gmra.mxu0 %v438
    %v512 = vpop.f32.mrf.mxu0
    %v513 = vadd.f32 0.0, %v512
    %v514 = vpop.f32.mrf.mxu0
    %515 = vmatprep.mubr.f32.mxu0 0.0
    %516 = vmatmul.mubr.f32.gmra.mxu0 %v440
    %v517 = vpop.f32.mrf.mxu0
    %v518 = vadd.f32 0.0, %v517
    %v519 = vpop.f32.mrf.mxu0
    %520 = vdwg.mxu0
    %v521 = vmul.f32 %v252, 0.35355338
    %v522 = vmul.f32 %v257, 0.35355338
    %v523 = vmul.f32 %v339, 0.35355338
    %v524 = vmul.f32 %v344, 0.35355338
    %v525 = vmul.f32 %v426, 0.35355338
    %v526 = vmul.f32 %v431, 0.35355338
    %v527 = vmul.f32 %v513, 0.35355338
    %v528 = vmul.f32 %v518, 0.35355338
    %v529 = vadd.f32 %v521, %v70
    %v530 = vadd.f32 %v522, %v71
    %v531 = vadd.f32 %v523, %v70
    %v532 = vadd.f32 %v524, %v71
    %v533 = vadd.f32 %v525, %v70
    %v534 = vadd.f32 %v526, %v71
    %v535 = vadd.f32 %v527, %v70
    %v536 = vadd.f32 %v528, %v71
    %vm537 = vcmask 130048
    %v538 = vsel %vm537, %v529, -inf
    %539 = vmax.xlane.f32.xlu0 %v538
    %v540 = vpop.xlane.xlu0 %539
    %v541 = vsel %vm537, %v530, -inf
    %542 = vmax.xlane.f32.xlu0 %v541
    %v543 = vpop.xlane.xlu0 %542
    %v544 = vsel %vm537, %v531, -inf
    %545 = vmax.xlane.f32.xlu0 %v544
    %v546 = vpop.xlane.xlu0 %545
    %v547 = vsel %vm537, %v532, -inf
    %548 = vmax.xlane.f32.xlu0 %v547
    %v549 = vpop.xlane.xlu0 %548
    %v550 = vsel %vm537, %v533, -inf
    %551 = vmax.xlane.f32.xlu0 %v550
    %v552 = vpop.xlane.xlu0 %551
    %v553 = vsel %vm537, %v534, -inf
    %554 = vmax.xlane.f32.xlu0 %v553
    %v555 = vpop.xlane.xlu0 %554
    %v556 = vsel %vm537, %v535, -inf
    %557 = vmax.xlane.f32.xlu0 %v556
    %v558 = vpop.xlane.xlu0 %557
    %v559 = vsel %vm537, %v536, -inf
    %560 = vmax.xlane.f32.xlu0 %v559
    %v561 = vpop.xlane.xlu0 %560
    %v562 = vsub.f32 %v529, %v540
    %v563 = vsub.f32 %v530, %v543
    %v564 = vsub.f32 %v531, %v546
    %v565 = vsub.f32 %v532, %v549
    %v566 = vsub.f32 %v533, %v552
    %v567 = vsub.f32 %v534, %v555
    %v568 = vsub.f32 %v535, %v558
    %v569 = vsub.f32 %v536, %v561
    %v570 = vmul.f32 %v562, 1.442695
    %v571 = vpow.pop %v570
    %v572 = vmul.f32 %v563, 1.442695
    %v573 = vpow.pop %v572
    %v574 = vmul.f32 %v564, 1.442695
    %v575 = vpow.pop %v574
    %v576 = vmul.f32 %v565, 1.442695
    %v577 = vpow.pop %v576
    %v578 = vmul.f32 %v566, 1.442695
    %v579 = vpow.pop %v578
    %v580 = vmul.f32 %v567, 1.442695
    %v581 = vpow.pop %v580
    %v582 = vmul.f32 %v568, 1.442695
    %v583 = vpow.pop %v582
    %v584 = vmul.f32 %v569, 1.442695
    %v585 = vpow.pop %v584
    %v586 = vsel %vm537, %v571, 0.0
    %587 = vadd.xlane.f32.xlu0 %v586
    %v588 = vpop.xlane.xlu0 %587
    %v589 = vsel %vm537, %v573, 0.0
    %590 = vadd.xlane.f32.xlu0 %v589
    %v591 = vpop.xlane.xlu0 %590
    %v592 = vsel %vm537, %v575, 0.0
    %593 = vadd.xlane.f32.xlu0 %v592
    %v594 = vpop.xlane.xlu0 %593
    %v595 = vsel %vm537, %v577, 0.0
    %596 = vadd.xlane.f32.xlu0 %v595
    %v597 = vpop.xlane.xlu0 %596
    %v598 = vsel %vm537, %v579, 0.0
    %599 = vadd.xlane.f32.xlu0 %v598
    %v600 = vpop.xlane.xlu0 %599
    %v601 = vsel %vm537, %v581, 0.0
    %602 = vadd.xlane.f32.xlu0 %v601
    %v603 = vpop.xlane.xlu0 %602
    %v604 = vsel %vm537, %v583, 0.0
    %605 = vadd.xlane.f32.xlu0 %v604
    %v606 = vpop.xlane.xlu0 %605
    %v607 = vsel %vm537, %v585, 0.0
    %608 = vadd.xlane.f32.xlu0 %v607
    %v609 = vpop.xlane.xlu0 %608
    %v610 = vrcp.pop %v588
    %v611 = vrcp.pop %v591
    %v612 = vrcp.pop %v594
    %v613 = vrcp.pop %v597
    %v614 = vrcp.pop %v600
    %v615 = vrcp.pop %v603
    %v616 = vrcp.pop %v606
    %v617 = vrcp.pop %v609
    %v618 = vmul.f32 %v571, %v610
    %v619 = vmul.f32 %v573, %v611
    %v620 = vmul.f32 %v575, %v612
    %v621 = vmul.f32 %v577, %v613
    %v622 = vmul.f32 %v579, %v614
    %v623 = vmul.f32 %v581, %v615
    %v624 = vmul.f32 %v583, %v616
    %v625 = vmul.f32 %v585, %v617
    %626 = vrot.lane.b32.xlu0 %v150, 64
    %v627 = vpop.permute.xlu0 %626
    %628 = vrot.lane.b32.xlu0 %v155, 64
    %v629 = vpop.permute.xlu0 %628
    %v633 = vsel %vm537, %v618, 0
    %v636 = vsel %vm537, %v619, 0
    %638 = vmatprep.subr.mxu0 0.0
    %639 = vmatpush1.msra.mxu0 0.0
    %640 = vmatprep.subr.mxu0 0.0
    %641 = vmatpush1.msra.mxu0 0.0
    %642 = vmatprep.subr.mxu0 0.0
    %643 = vmatpush1.msra.mxu0 0.0
    %644 = vmatprep.subr.mxu0 0.0
    %645 = vmatpush1.msra.mxu0 0.0
    %646 = vmatprep.subr.mxu0 0.0
    %647 = vmatpush1.msra.mxu0 0.0
    %648 = vmatprep.subr.mxu0 0.0
    %649 = vmatpush1.msra.mxu0 0.0
    %650 = vmatprep.subr.mxu0 0.0
    %651 = vmatpush1.msra.mxu0 0.0
    %652 = vmatprep.subr.mxu0 0.0
    %653 = vmatpush1.msra.mxu0 0.0
    %654 = vmatprep.subr.mxu0 0.0
    %655 = vmatpush1.msra.mxu0 0.0
    %656 = vmatprep.subr.mxu0 0.0
    %657 = vmatpush1.msra.mxu0 0.0
    %658 = vmatprep.subr.mxu0 0.0
    %659 = vmatpush1.msra.mxu0 0.0
    %660 = vmatprep.subr.mxu0 0.0
    %661 = vmatpush1.msra.mxu0 0.0
    %662 = vmatprep.subr.mxu0 0.0
    %663 = vmatpush1.msra.mxu0 0.0
    %664 = vmatprep.subr.mxu0 0.0
    %665 = vmatpush1.msra.mxu0 0.0
    %666 = vmatprep.subr.mxu0 0.0
    %667 = vmatpush1.msra.mxu0 %v629
    %668 = vmatprep.subr.mxu0 0.0
    %669 = vmatpush1.msra.mxu0 %v627
    %670 = vmatprep.subr.mxu0 0.0
    %671 = vmatpush2.msra.mxu0 0.0
    %672 = vmatprep.subr.mxu0 0.0
    %673 = vmatpush2.msra.mxu0 0.0
    %674 = vmatprep.subr.mxu0 0.0
    %675 = vmatpush2.msra.mxu0 0.0
    %676 = vmatprep.subr.mxu0 0.0
    %677 = vmatpush2.msra.mxu0 0.0
    %678 = vmatprep.subr.mxu0 0.0
    %679 = vmatpush2.msra.mxu0 0.0
    %680 = vmatprep.subr.mxu0 0.0
    %681 = vmatpush2.msra.mxu0 0.0
    %682 = vmatprep.subr.mxu0 0.0
    %683 = vmatpush2.msra.mxu0 0.0
    %684 = vmatprep.subr.mxu0 0.0
    %685 = vmatpush2.msra.mxu0 0.0
    %686 = vmatprep.subr.mxu0 0.0
    %687 = vmatpush2.msra.mxu0 0.0
    %688 = vmatprep.subr.mxu0 0.0
    %689 = vmatpush2.msra.mxu0 0.0
    %690 = vmatprep.subr.mxu0 0.0
    %691 = vmatpush2.msra.mxu0 0.0
    %692 = vmatprep.subr.mxu0 0.0
    %693 = vmatpush2.msra.mxu0 0.0
    %694 = vmatprep.subr.mxu0 0.0
    %695 = vmatpush2.msra.mxu0 0.0
    %696 = vmatprep.subr.mxu0 0.0
    %697 = vmatpush2.msra.mxu0 0.0
    %698 = vmatprep.subr.mxu0 0.0
    %699 = vmatpush2.msra.mxu0 0.0
    %700 = vmatprep.subr.mxu0 0.0
    %701 = vmatpush2.msra.mxu0 0.0
    %702 = vmatprep.mubr.f32.mxu0 0.0
    %703 = vmatmul.mubr.f32.gmra.mxu0 %v633
    %v704 = vpop.f32.mrf.mxu0
    %v705 = vadd.f32 0.0, %v704
    %v706 = vpop.f32.mrf.mxu0
    %707 = vmatprep.mubr.f32.mxu0 0.0
    %708 = vmatmul.mubr.f32.gmra.mxu0 %v636
    %v709 = vpop.f32.mrf.mxu0
    %v710 = vadd.f32 0.0, %v709
    %v711 = vpop.f32.mrf.mxu0
    %712 = vdwg.mxu0
    %713 = vrot.lane.b32.xlu0 %v161, 64
    %v714 = vpop.permute.xlu0 %713
    %715 = vrot.lane.b32.xlu0 %v163, 64
    %v716 = vpop.permute.xlu0 %715
    %v720 = vsel %vm537, %v620, 0
    %v723 = vsel %vm537, %v621, 0
    %725 = vmatprep.subr.mxu0 0.0
    %726 = vmatpush1.msra.mxu0 0.0
    %727 = vmatprep.subr.mxu0 0.0
    %728 = vmatpush1.msra.mxu0 0.0
    %729 = vmatprep.subr.mxu0 0.0
    %730 = vmatpush1.msra.mxu0 0.0
    %731 = vmatprep.subr.mxu0 0.0
    %732 = vmatpush1.msra.mxu0 0.0
    %733 = vmatprep.subr.mxu0 0.0
    %734 = vmatpush1.msra.mxu0 0.0
    %735 = vmatprep.subr.mxu0 0.0
    %736 = vmatpush1.msra.mxu0 0.0
    %737 = vmatprep.subr.mxu0 0.0
    %738 = vmatpush1.msra.mxu0 0.0
    %739 = vmatprep.subr.mxu0 0.0
    %740 = vmatpush1.msra.mxu0 0.0
    %741 = vmatprep.subr.mxu0 0.0
    %742 = vmatpush1.msra.mxu0 0.0
    %743 = vmatprep.subr.mxu0 0.0
    %744 = vmatpush1.msra.mxu0 0.0
    %745 = vmatprep.subr.mxu0 0.0
    %746 = vmatpush1.msra.mxu0 0.0
    %747 = vmatprep.subr.mxu0 0.0
    %748 = vmatpush1.msra.mxu0 0.0
    %749 = vmatprep.subr.mxu0 0.0
    %750 = vmatpush1.msra.mxu0 0.0
    %751 = vmatprep.subr.mxu0 0.0
    %752 = vmatpush1.msra.mxu0 0.0
    %753 = vmatprep.subr.mxu0 0.0
    %754 = vmatpush1.msra.mxu0 %v716
    %755 = vmatprep.subr.mxu0 0.0
    %756 = vmatpush1.msra.mxu0 %v714
    %757 = vmatprep.subr.mxu0 0.0
    %758 = vmatpush2.msra.mxu0 0.0
    %759 = vmatprep.subr.mxu0 0.0
    %760 = vmatpush2.msra.mxu0 0.0
    %761 = vmatprep.subr.mxu0 0.0
    %762 = vmatpush2.msra.mxu0 0.0
    %763 = vmatprep.subr.mxu0 0.0
    %764 = vmatpush2.msra.mxu0 0.0
    %765 = vmatprep.subr.mxu0 0.0
    %766 = vmatpush2.msra.mxu0 0.0
    %767 = vmatprep.subr.mxu0 0.0
    %768 = vmatpush2.msra.mxu0 0.0
    %769 = vmatprep.subr.mxu0 0.0
    %770 = vmatpush2.msra.mxu0 0.0
    %771 = vmatprep.subr.mxu0 0.0
    %772 = vmatpush2.msra.mxu0 0.0
    %773 = vmatprep.subr.mxu0 0.0
    %774 = vmatpush2.msra.mxu0 0.0
    %775 = vmatprep.subr.mxu0 0.0
    %776 = vmatpush2.msra.mxu0 0.0
    %777 = vmatprep.subr.mxu0 0.0
    %778 = vmatpush2.msra.mxu0 0.0
    %779 = vmatprep.subr.mxu0 0.0
    %780 = vmatpush2.msra.mxu0 0.0
    %781 = vmatprep.subr.mxu0 0.0
    %782 = vmatpush2.msra.mxu0 0.0
    %783 = vmatprep.subr.mxu0 0.0
    %784 = vmatpush2.msra.mxu0 0.0
    %785 = vmatprep.subr.mxu0 0.0
    %786 = vmatpush2.msra.mxu0 0.0
    %787 = vmatprep.subr.mxu0 0.0
    %788 = vmatpush2.msra.mxu0 0.0
    %789 = vmatprep.mubr.f32.mxu0 0.0
    %790 = vmatmul.mubr.f32.gmra.mxu0 %v720
    %v791 = vpop.f32.mrf.mxu0
    %v792 = vadd.f32 0.0, %v791
    %v793 = vpop.f32.mrf.mxu0
    %794 = vmatprep.mubr.f32.mxu0 0.0
    %795 = vmatmul.mubr.f32.gmra.mxu0 %v723
    %v796 = vpop.f32.mrf.mxu0
    %v797 = vadd.f32 0.0, %v796
    %v798 = vpop.f32.mrf.mxu0
    %799 = vdwg.mxu0
    %800 = vrot.lane.b32.xlu0 %v165, 64
    %v801 = vpop.permute.xlu0 %800
    %802 = vrot.lane.b32.xlu0 %v167, 64
    %v803 = vpop.permute.xlu0 %802
    %v807 = vsel %vm537, %v622, 0
    %v810 = vsel %vm537, %v623, 0
    %812 = vmatprep.subr.mxu0 0.0
    %813 = vmatpush1.msra.mxu0 0.0
    %814 = vmatprep.subr.mxu0 0.0
    %815 = vmatpush1.msra.mxu0 0.0
    %816 = vmatprep.subr.mxu0 0.0
    %817 = vmatpush1.msra.mxu0 0.0
    %818 = vmatprep.subr.mxu0 0.0
    %819 = vmatpush1.msra.mxu0 0.0
    %820 = vmatprep.subr.mxu0 0.0
    %821 = vmatpush1.msra.mxu0 0.0
    %822 = vmatprep.subr.mxu0 0.0
    %823 = vmatpush1.msra.mxu0 0.0
    %824 = vmatprep.subr.mxu0 0.0
    %825 = vmatpush1.msra.mxu0 0.0
    %826 = vmatprep.subr.mxu0 0.0
    %827 = vmatpush1.msra.mxu0 0.0
    %828 = vmatprep.subr.mxu0 0.0
    %829 = vmatpush1.msra.mxu0 0.0
    %830 = vmatprep.subr.mxu0 0.0
    %831 = vmatpush1.msra.mxu0 0.0
    %832 = vmatprep.subr.mxu0 0.0
    %833 = vmatpush1.msra.mxu0 0.0
    %834 = vmatprep.subr.mxu0 0.0
    %835 = vmatpush1.msra.mxu0 0.0
    %836 = vmatprep.subr.mxu0 0.0
    %837 = vmatpush1.msra.mxu0 0.0
    %838 = vmatprep.subr.mxu0 0.0
    %839 = vmatpush1.msra.mxu0 0.0
    %840 = vmatprep.subr.mxu0 0.0
    %841 = vmatpush1.msra.mxu0 %v803
    %842 = vmatprep.subr.mxu0 0.0
    %843 = vmatpush1.msra.mxu0 %v801
    %844 = vmatprep.subr.mxu0 0.0
    %845 = vmatpush2.msra.mxu0 0.0
    %846 = vmatprep.subr.mxu0 0.0
    %847 = vmatpush2.msra.mxu0 0.0
    %848 = vmatprep.subr.mxu0 0.0
    %849 = vmatpush2.msra.mxu0 0.0
    %850 = vmatprep.subr.mxu0 0.0
    %851 = vmatpush2.msra.mxu0 0.0
    %852 = vmatprep.subr.mxu0 0.0
    %853 = vmatpush2.msra.mxu0 0.0
    %854 = vmatprep.subr.mxu0 0.0
    %855 = vmatpush2.msra.mxu0 0.0
    %856 = vmatprep.subr.mxu0 0.0
    %857 = vmatpush2.msra.mxu0 0.0
    %858 = vmatprep.subr.mxu0 0.0
    %859 = vmatpush2.msra.mxu0 0.0
    %860 = vmatprep.subr.mxu0 0.0
    %861 = vmatpush2.msra.mxu0 0.0
    %862 = vmatprep.subr.mxu0 0.0
    %863 = vmatpush2.msra.mxu0 0.0
    %864 = vmatprep.subr.mxu0 0.0
    %865 = vmatpush2.msra.mxu0 0.0
    %866 = vmatprep.subr.mxu0 0.0
    %867 = vmatpush2.msra.mxu0 0.0
    %868 = vmatprep.subr.mxu0 0.0
    %869 = vmatpush2.msra.mxu0 0.0
    %870 = vmatprep.subr.mxu0 0.0
    %871 = vmatpush2.msra.mxu0 0.0
    %872 = vmatprep.subr.mxu0 0.0
    %873 = vmatpush2.msra.mxu0 0.0
    %874 = vmatprep.subr.mxu0 0.0
    %875 = vmatpush2.msra.mxu0 0.0
    %876 = vmatprep.mubr.f32.mxu0 0.0
    %877 = vmatmul.mubr.f32.gmra.mxu0 %v807
    %v878 = vpop.f32.mrf.mxu0
    %v879 = vadd.f32 0.0, %v878
    %v880 = vpop.f32.mrf.mxu0
    %881 = vmatprep.mubr.f32.mxu0 0.0
    %882 = vmatmul.mubr.f32.gmra.mxu0 %v810
    %v883 = vpop.f32.mrf.mxu0
    %v884 = vadd.f32 0.0, %v883
    %v885 = vpop.f32.mrf.mxu0
    %886 = vdwg.mxu0
    %887 = vrot.lane.b32.xlu0 %v169, 64
    %v888 = vpop.permute.xlu0 %887
    %889 = vrot.lane.b32.xlu0 %v171, 64
    %v890 = vpop.permute.xlu0 %889
    %v894 = vsel %vm537, %v624, 0
    %v897 = vsel %vm537, %v625, 0
    %899 = vmatprep.subr.mxu0 0.0
    %900 = vmatpush1.msra.mxu0 0.0
    %901 = vmatprep.subr.mxu0 0.0
    %902 = vmatpush1.msra.mxu0 0.0
    %903 = vmatprep.subr.mxu0 0.0
    %904 = vmatpush1.msra.mxu0 0.0
    %905 = vmatprep.subr.mxu0 0.0
    %906 = vmatpush1.msra.mxu0 0.0
    %907 = vmatprep.subr.mxu0 0.0
    %908 = vmatpush1.msra.mxu0 0.0
    %909 = vmatprep.subr.mxu0 0.0
    %910 = vmatpush1.msra.mxu0 0.0
    %911 = vmatprep.subr.mxu0 0.0
    %912 = vmatpush1.msra.mxu0 0.0
    %913 = vmatprep.subr.mxu0 0.0
    %914 = vmatpush1.msra.mxu0 0.0
    %915 = vmatprep.subr.mxu0 0.0
    %916 = vmatpush1.msra.mxu0 0.0
    %917 = vmatprep.subr.mxu0 0.0
    %918 = vmatpush1.msra.mxu0 0.0
    %919 = vmatprep.subr.mxu0 0.0
    %920 = vmatpush1.msra.mxu0 0.0
    %921 = vmatprep.subr.mxu0 0.0
    %922 = vmatpush1.msra.mxu0 0.0
    %923 = vmatprep.subr.mxu0 0.0
    %924 = vmatpush1.msra.mxu0 0.0
    %925 = vmatprep.subr.mxu0 0.0
    %926 = vmatpush1.msra.mxu0 0.0
    %927 = vmatprep.subr.mxu0 0.0
    %928 = vmatpush1.msra.mxu0 %v890
    %929 = vmatprep.subr.mxu0 0.0
    %930 = vmatpush1.msra.mxu0 %v888
    %931 = vmatprep.subr.mxu0 0.0
    %932 = vmatpush2.msra.mxu0 0.0
    %933 = vmatprep.subr.mxu0 0.0
    %934 = vmatpush2.msra.mxu0 0.0
    %935 = vmatprep.subr.mxu0 0.0
    %936 = vmatpush2.msra.mxu0 0.0
    %937 = vmatprep.subr.mxu0 0.0
    %938 = vmatpush2.msra.mxu0 0.0
    %939 = vmatprep.subr.mxu0 0.0
    %940 = vmatpush2.msra.mxu0 0.0
    %941 = vmatprep.subr.mxu0 0.0
    %942 = vmatpush2.msra.mxu0 0.0
    %943 = vmatprep.subr.mxu0 0.0
    %944 = vmatpush2.msra.mxu0 0.0
    %945 = vmatprep.subr.mxu0 0.0
    %946 = vmatpush2.msra.mxu0 0.0
    %947 = vmatprep.subr.mxu0 0.0
    %948 = vmatpush2.msra.mxu0 0.0
    %949 = vmatprep.subr.mxu0 0.0
    %950 = vmatpush2.msra.mxu0 0.0
    %951 = vmatprep.subr.mxu0 0.0
    %952 = vmatpush2.msra.mxu0 0.0
    %953 = vmatprep.subr.mxu0 0.0
    %954 = vmatpush2.msra.mxu0 0.0
    %955 = vmatprep.subr.mxu0 0.0
    %956 = vmatpush2.msra.mxu0 0.0
    %957 = vmatprep.subr.mxu0 0.0
    %958 = vmatpush2.msra.mxu0 0.0
    %959 = vmatprep.subr.mxu0 0.0
    %960 = vmatpush2.msra.mxu0 0.0
    %961 = vmatprep.subr.mxu0 0.0
    %962 = vmatpush2.msra.mxu0 0.0
    %963 = vmatprep.mubr.f32.mxu0 0.0
    %964 = vmatmul.mubr.f32.gmra.mxu0 %v894
    %v965 = vpop.f32.mrf.mxu0
    %v966 = vadd.f32 0.0, %v965
    %v967 = vpop.f32.mrf.mxu0
    %968 = vmatprep.mubr.f32.mxu0 0.0
    %969 = vmatmul.mubr.f32.gmra.mxu0 %v897
    %v970 = vpop.f32.mrf.mxu0
    %v971 = vadd.f32 0.0, %v970
    %v972 = vpop.f32.mrf.mxu0
    %973 = vdwg.mxu0
    %976 = vrot.lane.b32.xlu0 %v792, 8
    %v977 = vpop.permute.xlu0 %976
    %978 = vrot.lane.b32.xlu0 %v797, 8
    %v979 = vpop.permute.xlu0 %978
    %984 = vrot.lane.b32.xlu0 %v879, 16
    %v985 = vpop.permute.xlu0 %984
    %986 = vrot.lane.b32.xlu0 %v884, 16
    %v987 = vpop.permute.xlu0 %986
    %992 = vrot.lane.b32.xlu0 %v966, 24
    %v993 = vpop.permute.xlu0 %992
    %994 = vrot.lane.b32.xlu0 %v971, 24
    %v995 = vpop.permute.xlu0 %994
    %v998 = vsel %vm176, %v705, %v977
    %v999 = vsel %vm176, %v710, %v979
    %v1000 = vsel %vm537, %v998, %v985
    %v1001 = vsel %vm537, %v999, %v987
    %vm1002 = vcmask 195584
    %v1003 = vsel %vm1002, %v1000, %v993
    %v1004 = vsel %vm1002, %v1001, %v995
    %v1005 = vlaneseq
    %v1006 = vshrl.u32 %v1005, 7
    %v1007 = vsub.s32 0, %v1006
    %v1008 = vrot.slane %v63, %v1007
    %v1010 = vsel %vm76, %v1003, 0
    %v1013 = vsel %vm76, %v1004, 0
    %1015 = vmatprep.subr.mxu0 0.0
    %1016 = vmatpush1.msra.mxu0 0.0
    %1017 = vmatprep.subr.mxu0 0.0
    %1018 = vmatpush1.msra.mxu0 0.0
    %1019 = vmatprep.subr.mxu0 0.0
    %1020 = vmatpush1.msra.mxu0 0.0
    %1021 = vmatprep.subr.mxu0 0.0
    %1022 = vmatpush1.msra.mxu0 0.0
    %1023 = vmatprep.subr.mxu0 0.0
    %1024 = vmatpush1.msra.mxu0 0.0
    %1025 = vmatprep.subr.mxu0 0.0
    %1026 = vmatpush1.msra.mxu0 0.0
    %1027 = vmatprep.subr.mxu0 0.0
    %1028 = vmatpush1.msra.mxu0 0.0
    %1029 = vmatprep.subr.mxu0 0.0
    %1030 = vmatpush1.msra.mxu0 0.0
    %1031 = vmatprep.subr.mxu0 0.0
    %1032 = vmatpush1.msra.mxu0 0.0
    %1033 = vmatprep.subr.mxu0 0.0
    %1034 = vmatpush1.msra.mxu0 0.0
    %1035 = vmatprep.subr.mxu0 0.0
    %1036 = vmatpush1.msra.mxu0 0.0
    %1037 = vmatprep.subr.mxu0 0.0
    %1038 = vmatpush1.msra.mxu0 0.0
    %1039 = vmatprep.subr.mxu0 0.0
    %1040 = vmatpush1.msra.mxu0 %v49
    %1041 = vmatprep.subr.mxu0 0.0
    %1042 = vmatpush1.msra.mxu0 %v48
    %1043 = vmatprep.subr.mxu0 0.0
    %1044 = vmatpush1.msra.mxu0 %v47
    %1045 = vmatprep.subr.mxu0 0.0
    %1046 = vmatpush1.msra.mxu0 %v46
    %1047 = vmatprep.subr.mxu0 0.0
    %1048 = vmatpush2.msra.mxu0 0.0
    %1049 = vmatprep.subr.mxu0 0.0
    %1050 = vmatpush2.msra.mxu0 0.0
    %1051 = vmatprep.subr.mxu0 0.0
    %1052 = vmatpush2.msra.mxu0 0.0
    %1053 = vmatprep.subr.mxu0 0.0
    %1054 = vmatpush2.msra.mxu0 0.0
    %1055 = vmatprep.subr.mxu0 0.0
    %1056 = vmatpush2.msra.mxu0 0.0
    %1057 = vmatprep.subr.mxu0 0.0
    %1058 = vmatpush2.msra.mxu0 0.0
    %1059 = vmatprep.subr.mxu0 0.0
    %1060 = vmatpush2.msra.mxu0 0.0
    %1061 = vmatprep.subr.mxu0 0.0
    %1062 = vmatpush2.msra.mxu0 0.0
    %1063 = vmatprep.subr.mxu0 0.0
    %1064 = vmatpush2.msra.mxu0 0.0
    %1065 = vmatprep.subr.mxu0 0.0
    %1066 = vmatpush2.msra.mxu0 0.0
    %1067 = vmatprep.subr.mxu0 0.0
    %1068 = vmatpush2.msra.mxu0 0.0
    %1069 = vmatprep.subr.mxu0 0.0
    %1070 = vmatpush2.msra.mxu0 0.0
    %1071 = vmatprep.subr.mxu0 0.0
    %1072 = vmatpush2.msra.mxu0 0.0
    %1073 = vmatprep.subr.mxu0 0.0
    %1074 = vmatpush2.msra.mxu0 0.0
    %1075 = vmatprep.subr.mxu0 0.0
    %1076 = vmatpush2.msra.mxu0 0.0
    %1077 = vmatprep.subr.mxu0 0.0
    %1078 = vmatpush2.msra.mxu0 0.0
    %1079 = vmatprep.mubr.f32.mxu0 0.0
    %1080 = vmatmul.mubr.f32.gmra.mxu0 %v1010
    %v1081 = vpop.f32.mrf.mxu0
    %v1082 = vadd.f32 %v1008, %v1081
    %v1083 = vpop.f32.mrf.mxu0
    %1084 = vmatprep.mubr.f32.mxu0 0.0
    %1085 = vmatmul.mubr.f32.gmra.mxu0 %v1013
    %v1086 = vpop.f32.mrf.mxu0
    %v1087 = vadd.f32 %v1008, %v1086
    %v1088 = vpop.f32.mrf.mxu0
    %1089 = vdwg.mxu0
    %v1090 = vadd.f32 %v40, %v1082
    %v1091 = vadd.f32 %v41, %v1087
    %v1092 = vsel %vm76, %v1090, 0.0
    %1093 = vadd.xlane.f32.xlu0 %v1092
    %v1094 = vpop.xlane.xlu0 %1093
    %v1095 = vsel %vm76, %v1091, 0.0
    %1096 = vadd.xlane.f32.xlu0 %v1095
    %v1097 = vpop.xlane.xlu0 %1096
    %v1098 = vrcp.pop 32.0
    %v1099 = vmul.f32 %v1094, %v1098
    %v1100 = vmul.f32 %v1097, %v1098
    %v1101 = vsub.f32 %v1090, %v1099
    %v1102 = vsub.f32 %v1091, %v1100
    %v1103 = vmul.f32 %v1101, %v1101
    %v1104 = vmul.f32 %v1102, %v1102
    %v1105 = vsel %vm76, %v1103, 0.0
    %1106 = vadd.xlane.f32.xlu0 %v1105
    %v1107 = vpop.xlane.xlu0 %1106
    %v1108 = vsel %vm76, %v1104, 0.0
    %1109 = vadd.xlane.f32.xlu0 %v1108
    %v1110 = vpop.xlane.xlu0 %1109
    %v1111 = vmul.f32 %v1107, %v1098
    %v1112 = vmul.f32 %v1110, %v1098
    %v1113 = vadd.f32 %v1111, 1e-05
    %v1114 = vadd.f32 %v1112, 1e-05
    %v1115 = vrsqrt.pop %v1113
    %v1116 = vrsqrt.pop %v1114
    %v1117 = vmul.f32 %v1101, %v1115
    %v1118 = vmul.f32 %v1102, %v1116
    %v1119 = vlaneseq
    %v1120 = vshrl.u32 %v1119, 7
    %v1121 = vsub.s32 0, %v1120
    %v1122 = vrot.slane %v66, %v1121
    %v1123 = vmul.f32 %v1117, %v1122
    %v1124 = vmul.f32 %v1118, %v1122
    %v1125 = vlaneseq
    %v1126 = vshrl.u32 %v1125, 7
    %v1127 = vsub.s32 0, %v1126
    %v1128 = vrot.slane %v67, %v1127
    %v1129 = vadd.f32 %v1123, %v1128
    %v1130 = vadd.f32 %v1124, %v1128
    %v1131 = vlaneseq
    %v1132 = vshrl.u32 %v1131, 7
    %v1133 = vsub.s32 0, %v1132
    %v1134 = vrot.slane %v64, %v1133
    %v1136 = vsel %vm76, %v1129, 0
    %v1139 = vsel %vm76, %v1130, 0
    %1141 = vmatprep.subr.mxu0 0.0
    %1142 = vmatpush1.msra.mxu0 0.0
    %1143 = vmatprep.subr.mxu0 0.0
    %1144 = vmatpush1.msra.mxu0 0.0
    %1145 = vmatprep.subr.mxu0 0.0
    %1146 = vmatpush1.msra.mxu0 0.0
    %1147 = vmatprep.subr.mxu0 0.0
    %1148 = vmatpush1.msra.mxu0 0.0
    %1149 = vmatprep.subr.mxu0 0.0
    %1150 = vmatpush1.msra.mxu0 0.0
    %1151 = vmatprep.subr.mxu0 0.0
    %1152 = vmatpush1.msra.mxu0 0.0
    %1153 = vmatprep.subr.mxu0 0.0
    %1154 = vmatpush1.msra.mxu0 0.0
    %1155 = vmatprep.subr.mxu0 0.0
    %1156 = vmatpush1.msra.mxu0 0.0
    %1157 = vmatprep.subr.mxu0 0.0
    %1158 = vmatpush1.msra.mxu0 0.0
    %1159 = vmatprep.subr.mxu0 0.0
    %1160 = vmatpush1.msra.mxu0 0.0
    %1161 = vmatprep.subr.mxu0 0.0
    %1162 = vmatpush1.msra.mxu0 0.0
    %1163 = vmatprep.subr.mxu0 0.0
    %1164 = vmatpush1.msra.mxu0 0.0
    %1165 = vmatprep.subr.mxu0 0.0
    %1166 = vmatpush1.msra.mxu0 %v53
    %1167 = vmatprep.subr.mxu0 0.0
    %1168 = vmatpush1.msra.mxu0 %v52
    %1169 = vmatprep.subr.mxu0 0.0
    %1170 = vmatpush1.msra.mxu0 %v51
    %1171 = vmatprep.subr.mxu0 0.0
    %1172 = vmatpush1.msra.mxu0 %v50
    %1173 = vmatprep.subr.mxu0 0.0
    %1174 = vmatpush2.msra.mxu0 0.0
    %1175 = vmatprep.subr.mxu0 0.0
    %1176 = vmatpush2.msra.mxu0 0.0
    %1177 = vmatprep.subr.mxu0 0.0
    %1178 = vmatpush2.msra.mxu0 0.0
    %1179 = vmatprep.subr.mxu0 0.0
    %1180 = vmatpush2.msra.mxu0 0.0
    %1181 = vmatprep.subr.mxu0 0.0
    %1182 = vmatpush2.msra.mxu0 0.0
    %1183 = vmatprep.subr.mxu0 0.0
    %1184 = vmatpush2.msra.mxu0 0.0
    %1185 = vmatprep.subr.mxu0 0.0
    %1186 = vmatpush2.msra.mxu0 0.0
    %1187 = vmatprep.subr.mxu0 0.0
    %1188 = vmatpush2.msra.mxu0 0.0
    %1189 = vmatprep.subr.mxu0 0.0
    %1190 = vmatpush2.msra.mxu0 0.0
    %1191 = vmatprep.subr.mxu0 0.0
    %1192 = vmatpush2.msra.mxu0 0.0
    %1193 = vmatprep.subr.mxu0 0.0
    %1194 = vmatpush2.msra.mxu0 0.0
    %1195 = vmatprep.subr.mxu0 0.0
    %1196 = vmatpush2.msra.mxu0 0.0
    %1197 = vmatprep.subr.mxu0 0.0
    %1198 = vmatpush2.msra.mxu0 0.0
    %1199 = vmatprep.subr.mxu0 0.0
    %1200 = vmatpush2.msra.mxu0 0.0
    %1201 = vmatprep.subr.mxu0 0.0
    %1202 = vmatpush2.msra.mxu0 0.0
    %1203 = vmatprep.subr.mxu0 0.0
    %1204 = vmatpush2.msra.mxu0 0.0
    %1205 = vmatprep.mubr.f32.mxu0 0.0
    %1206 = vmatmul.mubr.f32.gmra.mxu0 %v1136
    %v1207 = vpop.f32.mrf.mxu0
    %v1208 = vadd.f32 %v1134, %v1207
    %v1209 = vpop.f32.mrf.mxu0
    %1210 = vmatprep.mubr.f32.mxu0 0.0
    %1211 = vmatmul.mubr.f32.gmra.mxu0 %v1139
    %v1212 = vpop.f32.mrf.mxu0
    %v1213 = vadd.f32 %v1134, %v1212
    %v1214 = vpop.f32.mrf.mxu0
    %1215 = vdwg.mxu0
    %v1216 = vmax.f32 %v1208, 0.0
    %v1217 = vmax.f32 %v1213, 0.0
    %v1218 = vlaneseq
    %v1219 = vshrl.u32 %v1218, 7
    %v1220 = vsub.s32 0, %v1219
    %v1221 = vrot.slane %v65, %v1220
    %vm1222 = vcmask 523264
    %v1224 = vsel %vm1222, %v1216, 0
    %v1227 = vsel %vm1222, %v1217, 0
    %1229 = vmatprep.subr.mxu0 0.0
    %1230 = vmatpush1.msra.mxu0 0.0
    %1231 = vmatprep.subr.mxu0 0.0
    %1232 = vmatpush1.msra.mxu0 0.0
    %1233 = vmatprep.subr.mxu0 0.0
    %1234 = vmatpush1.msra.mxu0 0.0
    %1235 = vmatprep.subr.mxu0 0.0
    %1236 = vmatpush1.msra.mxu0 0.0
    %1237 = vmatprep.subr.mxu0 0.0
    %1238 = vmatpush1.msra.mxu0 0.0
    %1239 = vmatprep.subr.mxu0 0.0
    %1240 = vmatpush1.msra.mxu0 0.0
    %1241 = vmatprep.subr.mxu0 0.0
    %1242 = vmatpush1.msra.mxu0 0.0
    %1243 = vmatprep.subr.mxu0 0.0
    %1244 = vmatpush1.msra.mxu0 0.0
    %1245 = vmatprep.subr.mxu0 0.0
    %1246 = vmatpush1.msra.mxu0 %v61
    %1247 = vmatprep.subr.mxu0 0.0
    %1248 = vmatpush1.msra.mxu0 %v60
    %1249 = vmatprep.subr.mxu0 0.0
    %1250 = vmatpush1.msra.mxu0 %v59
    %1251 = vmatprep.subr.mxu0 0.0
    %1252 = vmatpush1.msra.mxu0 %v58
    %1253 = vmatprep.subr.mxu0 0.0
    %1254 = vmatpush1.msra.mxu0 %v57
    %1255 = vmatprep.subr.mxu0 0.0
    %1256 = vmatpush1.msra.mxu0 %v56
    %1257 = vmatprep.subr.mxu0 0.0
    %1258 = vmatpush1.msra.mxu0 %v55
    %1259 = vmatprep.subr.mxu0 0.0
    %1260 = vmatpush1.msra.mxu0 %v54
    %1261 = vmatprep.subr.mxu0 0.0
    %1262 = vmatpush2.msra.mxu0 0.0
    %1263 = vmatprep.subr.mxu0 0.0
    %1264 = vmatpush2.msra.mxu0 0.0
    %1265 = vmatprep.subr.mxu0 0.0
    %1266 = vmatpush2.msra.mxu0 0.0
    %1267 = vmatprep.subr.mxu0 0.0
    %1268 = vmatpush2.msra.mxu0 0.0
    %1269 = vmatprep.subr.mxu0 0.0
    %1270 = vmatpush2.msra.mxu0 0.0
    %1271 = vmatprep.subr.mxu0 0.0
    %1272 = vmatpush2.msra.mxu0 0.0
    %1273 = vmatprep.subr.mxu0 0.0
    %1274 = vmatpush2.msra.mxu0 0.0
    %1275 = vmatprep.subr.mxu0 0.0
    %1276 = vmatpush2.msra.mxu0 0.0
    %1277 = vmatprep.subr.mxu0 0.0
    %1278 = vmatpush2.msra.mxu0 0.0
    %1279 = vmatprep.subr.mxu0 0.0
    %1280 = vmatpush2.msra.mxu0 0.0
    %1281 = vmatprep.subr.mxu0 0.0
    %1282 = vmatpush2.msra.mxu0 0.0
    %1283 = vmatprep.subr.mxu0 0.0
    %1284 = vmatpush2.msra.mxu0 0.0
    %1285 = vmatprep.subr.mxu0 0.0
    %1286 = vmatpush2.msra.mxu0 0.0
    %1287 = vmatprep.subr.mxu0 0.0
    %1288 = vmatpush2.msra.mxu0 0.0
    %1289 = vmatprep.subr.mxu0 0.0
    %1290 = vmatpush2.msra.mxu0 0.0
    %1291 = vmatprep.subr.mxu0 0.0
    %1292 = vmatpush2.msra.mxu0 0.0
    %1293 = vmatprep.mubr.f32.mxu0 0.0
    %1294 = vmatmul.mubr.f32.gmra.mxu0 %v1224
    %v1295 = vpop.f32.mrf.mxu0
    %v1296 = vadd.f32 %v1221, %v1295
    %v1297 = vpop.f32.mrf.mxu0
    %1298 = vmatprep.mubr.f32.mxu0 0.0
    %1299 = vmatmul.mubr.f32.gmra.mxu0 %v1227
    %v1300 = vpop.f32.mrf.mxu0
    %v1301 = vadd.f32 %v1221, %v1300
    %v1302 = vpop.f32.mrf.mxu0
    %1303 = vdwg.mxu0
    %v1304 = vadd.f32 %v1129, %v1296
    %v1305 = vadd.f32 %v1130, %v1301
    %v1306 = vsel %vm76, %v1304, 0.0
    %1307 = vadd.xlane.f32.xlu0 %v1306
    %v1308 = vpop.xlane.xlu0 %1307
    %v1309 = vsel %vm76, %v1305, 0.0
    %1310 = vadd.xlane.f32.xlu0 %v1309
    %v1311 = vpop.xlane.xlu0 %1310
    %v1312 = vmul.f32 %v1308, %v1098
    %v1313 = vmul.f32 %v1311, %v1098
    %v1314 = vsub.f32 %v1304, %v1312
    %v1315 = vsub.f32 %v1305, %v1313
    %v1316 = vmul.f32 %v1314, %v1314
    %v1317 = vmul.f32 %v1315, %v1315
    %v1318 = vsel %vm76, %v1316, 0.0
    %1319 = vadd.xlane.f32.xlu0 %v1318
    %v1320 = vpop.xlane.xlu0 %1319
    %v1321 = vsel %vm76, %v1317, 0.0
    %1322 = vadd.xlane.f32.xlu0 %v1321
    %v1323 = vpop.xlane.xlu0 %1322
    %v1324 = vmul.f32 %v1320, %v1098
    %v1325 = vmul.f32 %v1323, %v1098
    %v1326 = vadd.f32 %v1324, 1e-05
    %v1327 = vadd.f32 %v1325, 1e-05
    %v1328 = vrsqrt.pop %v1326
    %v1329 = vrsqrt.pop %v1327
    %v1330 = vmul.f32 %v1314, %v1328
    %v1331 = vmul.f32 %v1315, %v1329
    %v1332 = vlaneseq
    %v1333 = vshrl.u32 %v1332, 7
    %v1334 = vsub.s32 0, %v1333
    %v1335 = vrot.slane %v68, %v1334
    %v1336 = vmul.f32 %v1330, %v1335
    %v1337 = vmul.f32 %v1331, %v1335
    %v1338 = vlaneseq
    %v1339 = vshrl.u32 %v1338, 7
    %v1340 = vsub.s32 0, %v1339
    %v1341 = vrot.slane %v69, %v1340
    %v1342 = vadd.f32 %v1336, %v1341
    %v1343 = vadd.f32 %v1337, %v1341
    %1344 = vst.msk [vmem:[#allocation7] sm:$0xff] %vm76, %v1342
    %1345 = vst.msk [vmem:[#allocation7 + $0x8] sm:$0xff] %vm76, %v1343
    // Predicated region
    $region18: #{transformer_encoder_layer.1} parent=1 // pred_check
      _
    $region19: #{transformer_encoder_layer.1} parent=1 // pred_check_branch
      %1347 = sbr.rel (0) target = $region21
    $region20: #{transformer_encoder_layer.1} parent=1 // pred_region
      %s1349 = ssub.s32 256, 256
      %1350 = vsyncadd [#allocation4], %s1349
      %s1351 = sshll.u32 [#allocation7], 4
      %s1352 = int_to_ptr.vmem [resolvable:$true] %s1351
      %1357 = dma.vmem_to_hbm [thread:$0]  %s1352, 256, %s2, [#allocation4], 128, 128, 8
    $region21: #{transformer_encoder_layer.1} parent=1 // pred_fallthru
      _
    // Predicated region
    $region22: #{transformer_encoder_layer.1} parent=1 // pred_check
      _
    $region23: #{transformer_encoder_layer.1} parent=1 // pred_check_branch
      %1359 = sbr.rel (0) target = $region25
    $region24: #{transformer_encoder_layer.1} parent=1 // pred_region
      %1360 = dma.done [#allocation4], 256
    $region25: #{transformer_encoder_layer.1} parent=1 // pred_fallthru
      _
    %1361 = vsyncpa [#allocation3], 1
    %1362 = vsyncpa [#allocation6], 1
    %1363 = vsyncpa [#allocation4], 1

</llo_original>
